<compile_context>
chip_gen: v7x
topology: tpu7x:2x2x1
jax: 0.10.0
libtpu: 0.0.40
codegen_flags: <defaults>
</compile_context>

<pallas_src>
import jax
import jax.numpy as jnp
from jax.experimental import pallas as pl
from jax.experimental.pallas import tpu as pltpu

HIDDEN = 64   # hidden width of both Linear layers
CHUNK = 128   # batch rows processed per inner-loop chunk (keeps live ranges in vregs)


def critic_mlp_kernel(x_ref, w1t_ref, b1_ref, w2t_ref, b2_ref, w3_ref, b3_ref, o_ref):
    """One batch tile of the 3-layer MLP.  x_ref: [bt, state_dim], o_ref: [bt, 1]."""
    # f32 inputs -> exact f32 matmul (torch parity); bf16 inputs -> native MXU path.
    prec = jax.lax.Precision.HIGHEST if x_ref.dtype == jnp.float32 else None

    # Tiny, grid-invariant operands: load once per grid step, reuse across chunks.
    w1t = w1t_ref[...]                       # [state_dim, 64]  (pre-transposed)
    w2t = w2t_ref[...]                       # [64, 64]         (pre-transposed)
    b1 = b1_ref[...]                         # [1, 64] row -> cheap sublane broadcast
    b2 = b2_ref[...]                         # [1, 64]
    w3 = w3_ref[...].astype(jnp.float32)     # [1, 64] row (used on the VPU)
    b3 = b3_ref[...]                         # [1, 1]

    bt = x_ref.shape[0]
    assert bt % CHUNK == 0, "wrapper guarantees the batch tile is a multiple of CHUNK"
    n_chunks = bt // CHUNK

    @pl.loop(0, n_chunks)
    def _(c):
        r = pl.multiple_of(c * CHUNK, CHUNK)
        x = x_ref[pl.ds(r, CHUNK), :]                              # [CH, state_dim]

        # Layer 1: batch streams on M, weight [state_dim, 64] stays latched.
        h1 = jnp.dot(x, w1t, preferred_element_type=jnp.float32, precision=prec)
        h1 = jnp.maximum(h1 + b1, 0.0)                             # [CH, 64]

        # Layer 2: same orientation, weight [64, 64] latched once.
        h2 = jnp.dot(h1.astype(w2t.dtype), w2t,
                     preferred_element_type=jnp.float32, precision=prec)
        h2 = jnp.maximum(h2 + b2, 0.0)                             # [CH, 64]

        # Layer 3 (Linear(64,1)): an N=1 MXU matmul would waste the array;
        # VPU multiply + XLU lane-reduce yields the [CH, 1] column directly.
        col = jnp.sum(h2 * w3, axis=1, keepdims=True) + b3         # [CH, 1]
        o_ref[pl.ds(r, CHUNK), :] = col.astype(o_ref.dtype)


def _round_up(x, m):
    return ((x + m - 1) // m) * m


def _vmem_budget_and_limit():
    """Generation-aware VMEM budget (for tile sizing) and explicit scoped limit."""
    try:
        cap = int(getattr(pltpu.get_tpu_info(), "vmem_capacity_bytes", 64 << 20))
    except Exception:  # not on TPU / API unavailable -> conservative default
        cap = 64 << 20
    budget = min(cap // 3, 20 << 20)          # what our tiles may consume
    limit = int(min(cap // 2, 32 << 20))      # raises v5e's 16 MiB scoped default
    return budget, limit


def critic_forward(states, params, *, batch_tile=4096, use_bf16=False):
    """states: [B, state_dim] -> [B, 1] float32 (matches torch Critic_Model.forward)."""
    w1, b1, w2, b2, w3, b3 = params           # torch nn.Linear layouts ([out, in], [out])
    B, state_dim = states.shape
    in_dtype = jnp.bfloat16 if use_bf16 else jnp.float32
    itemsize = 2 if use_bf16 else 4

    # ---- VMEM-budgeted batch tile ------------------------------------------
    budget, vmem_limit = _vmem_budget_and_limit()
    fixed = 256 * 1024                                    # weights + chunk temporaries
    per_row = 2 * state_dim * itemsize + 2 * 128 * 4      # x dbl-buf + lane-padded out dbl-buf
    bt_cap = max(CHUNK, ((budget - fixed) // per_row) // CHUNK * CHUNK)
    bt_max = min(_round_up(batch_tile, CHUNK), bt_cap)

    # ---- grid: >= 2 steps when possible so v7x's second TensorCore is used --
    b128 = _round_up(B, CHUNK)
    min_steps = 2 if b128 >= 2 * CHUNK else 1
    n_steps = max(pl.cdiv(b128, bt_max), min_steps)
    bt = _round_up(pl.cdiv(b128, n_steps), CHUNK)
    b_pad = n_steps * bt

    x = states.astype(in_dtype)
    if b_pad != B:
        x = jnp.pad(x, ((0, b_pad - B), (0, 0)))

    # ---- one-time layout prep (tiny): weights [in, out], biases as rows -----
    w1t = w1.T.astype(in_dtype)                           # [state_dim, 64]
    w2t = w2.T.astype(in_dtype)                           # [64, 64]
    b1r = b1.reshape(1, HIDDEN).astype(jnp.float32)
    b2r = b2.reshape(1, HIDDEN).astype(jnp.float32)
    w3r = w3.reshape(1, HIDDEN).astype(jnp.float32)       # Linear(64,1) weight as a row
    b3s = b3.reshape(1, 1).astype(jnp.float32)

    const2 = lambda shape: pl.BlockSpec(shape, lambda i: (0, 0))

    out = pl.pallas_call(
        critic_mlp_kernel,
        out_shape=jax.ShapeDtypeStruct((b_pad, 1), jnp.float32),
        grid_spec=pltpu.PrefetchScalarGridSpec(
            num_scalar_prefetch=0,
            grid=(n_steps,),
            in_specs=[
                pl.BlockSpec((bt, state_dim), lambda i: (i, 0)),   # x tile (batch on M)
                const2((state_dim, HIDDEN)),                       # W1^T
                const2((1, HIDDEN)),                               # b1 row
                const2((HIDDEN, HIDDEN)),                          # W2^T
                const2((1, HIDDEN)),                               # b2 row
                const2((1, HIDDEN)),                               # W3 row
                const2((1, 1)),                                    # b3
            ],
            out_specs=pl.BlockSpec((bt, 1), lambda i: (i, 0)),
        ),
        compiler_params=pltpu.CompilerParams(
            dimension_semantics=("parallel",),        # shards grid steps across TCs on v7x
            vmem_limit_bytes=vmem_limit),
    )(x, w1t, b1r, w2t, b2r, w3r, b3s)

    return out[:B]


def init_params(key, state_dim):
    """Deterministic init matching torch nn.Linear default (uniform +-1/sqrt(fan_in))."""
    ks = jax.random.split(key, 6)

    def u(k, shape, fan_in):
        bound = 1.0 / jnp.sqrt(fan_in)
        return jax.random.uniform(k, shape, jnp.float32, -bound, bound)

    w1 = u(ks[0], (HIDDEN, state_dim), state_dim)
    b1 = u(ks[1], (HIDDEN,), state_dim)
    w2 = u(ks[2], (HIDDEN, HIDDEN), HIDDEN)
    b2 = u(ks[3], (HIDDEN,), HIDDEN)
    w3 = u(ks[4], (1, HIDDEN), HIDDEN)
    b3 = u(ks[5], (1,), HIDDEN)
    return (w1, b1, w2, b2, w3, b3)


def critic_forward_ref(states, params):
    w1, b1, w2, b2, w3, b3 = params
    hp = jax.lax.Precision.HIGHEST
    h1 = jnp.maximum(jnp.dot(states, w1.T, precision=hp) + b1, 0.0)
    h2 = jnp.maximum(jnp.dot(h1, w2.T, precision=hp) + b2, 0.0)
    return jnp.dot(h2, w3.T, precision=hp) + b3


if __name__ == "__main__":
    key = jax.random.PRNGKey(0)
    k_params, k_s1, k_s2 = jax.random.split(key, 3)

    state_dim, action_dim = 32, 4      # action_dim is unused by the critic network
    params = init_params(k_params, state_dim)

    # Case 1: tiny batch -> padded to one 128-row tile, single grid step.
    states_small = jax.random.normal(k_s1, (16, state_dim), jnp.float32)
    out_small = jax.block_until_ready(critic_forward(states_small, params))
    ref_small = critic_forward_ref(states_small, params)
    assert out_small.shape == (16, 1)
    assert jnp.allclose(out_small, ref_small, atol=1e-5, rtol=1e-5), "mismatch (small batch)"

    # Case 2: ragged batch -> padded to 256 rows, 2 grid steps (megacore split on v7x).
    states_big = jax.random.normal(k_s2, (200, state_dim), jnp.float32)
    out_big = jax.block_until_ready(critic_forward(states_big, params))
    ref_big = critic_forward_ref(states_big, params)
    assert out_big.shape == (200, 1)
    assert jnp.allclose(out_big, ref_big, atol=1e-5, rtol=1e-5), "mismatch (tiled batch)"

    # Case 3: optional bf16 input path (halves x HBM traffic; loose tolerance).
    out_bf16 = jax.block_until_ready(critic_forward(states_big, params, use_bf16=True))
    assert out_bf16.shape == (200, 1)
    assert jnp.allclose(out_bf16, ref_big, atol=5e-2, rtol=5e-2), "mismatch (bf16 path)"

    print("KERNEL_OK")
</pallas_src>

<mosaic_0001>
module attributes {stable_mosaic.version = 11 : i64} {
  func.func @critic_mlp_kernel(%arg0: i32, %arg1: memref<128x32xf32, #tpu.memory_space<vmem>>, %arg2: memref<32x64xf32, #tpu.memory_space<vmem>>, %arg3: memref<1x64xf32, #tpu.memory_space<vmem>>, %arg4: memref<64x64xf32, #tpu.memory_space<vmem>>, %arg5: memref<1x64xf32, #tpu.memory_space<vmem>>, %arg6: memref<1x64xf32, #tpu.memory_space<vmem>>, %arg7: memref<1x1xf32, #tpu.memory_space<vmem>>, %arg8: memref<128x1xf32, #tpu.memory_space<vmem>>) attributes {dimension_semantics = [#tpu.dimension_semantics<parallel>], iteration_bounds = array<i64: 1>, scalar_prefetch = 0 : i64, scratch_operands = 0 : i64, tpu.core_type = #tpu.core_type<tc>, window_params = [{transform_indices = @transform_0, window_bounds = array<i64: 128, 32>}, {pipeline_mode = #tpu.pipeline_mode<synchronous>, transform_indices = @transform_1, window_bounds = array<i64: 32, 64>}, {pipeline_mode = #tpu.pipeline_mode<synchronous>, transform_indices = @transform_2, window_bounds = array<i64: 1, 64>}, {pipeline_mode = #tpu.pipeline_mode<synchronous>, transform_indices = @transform_3, window_bounds = array<i64: 64, 64>}, {pipeline_mode = #tpu.pipeline_mode<synchronous>, transform_indices = @transform_4, window_bounds = array<i64: 1, 64>}, {pipeline_mode = #tpu.pipeline_mode<synchronous>, transform_indices = @transform_5, window_bounds = array<i64: 1, 64>}, {pipeline_mode = #tpu.pipeline_mode<synchronous>, transform_indices = @transform_6, window_bounds = array<i64: 1, 1>}, {transform_indices = @transform_7, window_bounds = array<i64: 128, 1>}]} {
    %c0 = arith.constant 0 : index
    %c0_0 = arith.constant 0 : index
    %0 = vector.load %arg2[%c0, %c0_0] : memref<32x64xf32, #tpu.memory_space<vmem>>, vector<32x64xf32>
    %c0_1 = arith.constant 0 : index
    %c0_2 = arith.constant 0 : index
    %1 = vector.load %arg4[%c0_1, %c0_2] : memref<64x64xf32, #tpu.memory_space<vmem>>, vector<64x64xf32>
    %c0_3 = arith.constant 0 : index
    %c0_4 = arith.constant 0 : index
    %2 = vector.load %arg3[%c0_3, %c0_4] : memref<1x64xf32, #tpu.memory_space<vmem>>, vector<1x64xf32>
    %c0_5 = arith.constant 0 : index
    %c0_6 = arith.constant 0 : index
    %3 = vector.load %arg5[%c0_5, %c0_6] : memref<1x64xf32, #tpu.memory_space<vmem>>, vector<1x64xf32>
    %c0_7 = arith.constant 0 : index
    %c0_8 = arith.constant 0 : index
    %4 = vector.load %arg6[%c0_7, %c0_8] : memref<1x64xf32, #tpu.memory_space<vmem>>, vector<1x64xf32>
    %c0_9 = arith.constant 0 : index
    %c0_10 = arith.constant 0 : index
    %5 = vector.load %arg7[%c0_9, %c0_10] : memref<1x1xf32, #tpu.memory_space<vmem>>, vector<1x1xf32>
    %c0_i32 = arith.constant 0 : i32
    %c1_i32 = arith.constant 1 : i32
    %6 = arith.muli %c0_i32, %c1_i32 : i32
    %c0_i32_11 = arith.constant 0 : i32
    %7 = arith.addi %c0_i32_11, %6 : i32
    %c128_i32 = arith.constant 128 : i32
    %8 = arith.muli %7, %c128_i32 : i32
    %9 = tpu.assume_multiple %8, 128 : i32
    %10 = arith.index_cast %9 : i32 to index
    %c0_12 = arith.constant 0 : index
    %11 = vector.load %arg1[%10, %c0_12] : memref<128x32xf32, #tpu.memory_space<vmem>>, vector<128x32xf32>
    %cst = arith.constant dense<0.000000e+00> : vector<128x64xf32>
    %12 = tpu.matmul %11, %0, %cst {dimension_numbers = #tpu.dot_dimension_numbers<[1], [0], [0], [1], [0, 0, 1, 1], [], []>, precision = #tpu.contract_precision<fp32>} : vector<128x32xf32>, vector<32x64xf32>, vector<128x64xf32> -> vector<128x64xf32>
    %13 = vector.broadcast %2 : vector<1x64xf32> to vector<128x64xf32>
    %14 = arith.addf %12, %13 : vector<128x64xf32>
    %cst_13 = arith.constant 0.000000e+00 : f32
    %15 = vector.broadcast %cst_13 : f32 to vector<128x64xf32>
    %16 = arith.maximumf %14, %15 : vector<128x64xf32>
    %cst_14 = arith.constant dense<0.000000e+00> : vector<128x64xf32>
    %17 = tpu.matmul %16, %1, %cst_14 {dimension_numbers = #tpu.dot_dimension_numbers<[1], [0], [0], [1], [0, 0, 1, 1], [], []>, precision = #tpu.contract_precision<fp32>} : vector<128x64xf32>, vector<64x64xf32>, vector<128x64xf32> -> vector<128x64xf32>
    %18 = vector.broadcast %3 : vector<1x64xf32> to vector<128x64xf32>
    %19 = arith.addf %17, %18 : vector<128x64xf32>
    %cst_15 = arith.constant 0.000000e+00 : f32
    %20 = vector.broadcast %cst_15 : f32 to vector<128x64xf32>
    %21 = arith.maximumf %19, %20 : vector<128x64xf32>
    %22 = vector.broadcast %4 : vector<1x64xf32> to vector<128x64xf32>
    %23 = arith.mulf %21, %22 : vector<128x64xf32>
    %cst_16 = arith.constant dense<0.000000e+00> : vector<128xf32>
    %24 = vector.multi_reduction <add>, %23, %cst_16 [1] : vector<128x64xf32> to vector<128xf32>
    %25 = vector.shape_cast %24 : vector<128xf32> to vector<128x1xf32>
    %26 = vector.broadcast %5 : vector<1x1xf32> to vector<128x1xf32>
    %27 = arith.addf %25, %26 : vector<128x1xf32>
    %28 = arith.index_cast %9 : i32 to index
    %c0_17 = arith.constant 0 : index
    %29 = vector.load %arg8[%28, %c0_17] : memref<128x1xf32, #tpu.memory_space<vmem>>, vector<128x1xf32>
    tpu.vector_store %arg8[%28, %c0_17], %27 {strides = array<i32>} : memref<128x1xf32, #tpu.memory_space<vmem>>, vector<128x1xf32>,
    %c1_i32_18 = arith.constant 1 : i32
    return
  }
  func.func @transform_0(%arg0: i32) -> (i32, i32) {
    %c0_i32 = arith.constant 0 : i32
    %c0_i32_0 = arith.constant 0 : i32
    return %arg0, %c0_i32 : i32, i32
  }
  func.func @transform_1(%arg0: i32) -> (i32, i32) {
    %c0_i32 = arith.constant 0 : i32
    %c0_i32_0 = arith.constant 0 : i32
    %c0_i32_1 = arith.constant 0 : i32
    return %c0_i32, %c0_i32_0 : i32, i32
  }
  func.func @transform_2(%arg0: i32) -> (i32, i32) {
    %c0_i32 = arith.constant 0 : i32
    %c0_i32_0 = arith.constant 0 : i32
    %c0_i32_1 = arith.constant 0 : i32
    return %c0_i32, %c0_i32_0 : i32, i32
  }
  func.func @transform_3(%arg0: i32) -> (i32, i32) {
    %c0_i32 = arith.constant 0 : i32
    %c0_i32_0 = arith.constant 0 : i32
    %c0_i32_1 = arith.constant 0 : i32
    return %c0_i32, %c0_i32_0 : i32, i32
  }
  func.func @transform_4(%arg0: i32) -> (i32, i32) {
    %c0_i32 = arith.constant 0 : i32
    %c0_i32_0 = arith.constant 0 : i32
    %c0_i32_1 = arith.constant 0 : i32
    return %c0_i32, %c0_i32_0 : i32, i32
  }
  func.func @transform_5(%arg0: i32) -> (i32, i32) {
    %c0_i32 = arith.constant 0 : i32
    %c0_i32_0 = arith.constant 0 : i32
    %c0_i32_1 = arith.constant 0 : i32
    return %c0_i32, %c0_i32_0 : i32, i32
  }
  func.func @transform_6(%arg0: i32) -> (i32, i32) {
    %c0_i32 = arith.constant 0 : i32
    %c0_i32_0 = arith.constant 0 : i32
    %c0_i32_1 = arith.constant 0 : i32
    return %c0_i32, %c0_i32_0 : i32, i32
  }
  func.func @transform_7(%arg0: i32) -> (i32, i32) {
    %c0_i32 = arith.constant 0 : i32
    %c0_i32_0 = arith.constant 0 : i32
    return %arg0, %c0_i32 : i32, i32
  }
}

</mosaic_0001>

<llo_original>
// kernel: tpu_custom_call.1
$region0: #{tpu_custom_call.1}
  #allocation0 [shape = 'u32[]', space=smem, size = 0x4, offset = 0x4, fixed_abs, tag = 'smem constant byte address 0x4 - core index']
  #allocation1 [shape = 'u32[144,128]{1,0:T(1,128)}', space=vmem, size = 0x12000, scoped, tag = 'internal scratch']
  #allocation2 [shape = 'f32[1,1]{1,0:T(1,128)S(1)}', space=vmem, size = 0x200, scoped, tag = 'scoped memory for tpu_custom_call.1']
  %s0 = inlined_call_operand.vmem [shape: f32[128,32], index: 0, kind: input, shape index: {}]
  %s1 = inlined_call_operand.vmem [shape: f32[32,64], index: 1, kind: input, shape index: {}]
  %s2 = inlined_call_operand.vmem [shape: f32[1,64], index: 2, kind: input, shape index: {}]
  %s3 = inlined_call_operand.vmem [shape: f32[64,64], index: 3, kind: input, shape index: {}]
  %s4 = inlined_call_operand.vmem [shape: f32[1,64], index: 4, kind: input, shape index: {}]
  %s5 = inlined_call_operand.vmem [shape: f32[1,64], index: 5, kind: input, shape index: {}]
  %s6 = inlined_call_operand.<no memory space> [shape: f32[1,1], index: 6, kind: input, shape index: {}]
  %s7 = inlined_call_operand.vmem [shape: f32[128,1], index: 7, kind: output, shape index: {}]
  %s8 = sld [smem:[#allocation0]]
  $region38: #{tpu_custom_call.1} parent=0
    _
  %s10 = ssub.s32 1, %s8
  %s11 = scalar_select 0, %s10, %s8
  %v12 = vstv %s6
  %13 = vst [vmem:[#allocation2] sm:$0x1] %v12
  // Predicated region
  $region2: #{tpu_custom_call.1} parent=0 // pred_check
    _
  $region3: #{tpu_custom_call.1} parent=0 // pred_check_branch
    %15 = sbr.rel (0) target = $region5
  $region4: #{tpu_custom_call.1} parent=0 // pred_region
    _
  $region5: #{tpu_custom_call.1} parent=0 // pred_fallthru
    _
  // Predicated region
  $region6: #{tpu_custom_call.1} parent=0 // pred_check
    _
  $region7: #{tpu_custom_call.1} parent=0 // pred_check_branch
    %17 = sbr.rel (0) target = $region9
  $region8: #{tpu_custom_call.1} parent=0 // pred_region
    _
  $region9: #{tpu_custom_call.1} parent=0 // pred_fallthru
    _
  // Predicated region
  $region10: #{tpu_custom_call.1} parent=0 // pred_check
    _
  $region11: #{tpu_custom_call.1} parent=0 // pred_check_branch
    %19 = sbr.rel (0) target = $region13
  $region12: #{tpu_custom_call.1} parent=0 // pred_region
    _
  $region13: #{tpu_custom_call.1} parent=0 // pred_fallthru
    _
  // Predicated region
  $region14: #{tpu_custom_call.1} parent=0 // pred_check
    _
  $region15: #{tpu_custom_call.1} parent=0 // pred_check_branch
    %21 = sbr.rel (0) target = $region17
  $region16: #{tpu_custom_call.1} parent=0 // pred_region
    _
  $region17: #{tpu_custom_call.1} parent=0 // pred_fallthru
    _
  // Predicated region
  $region18: #{tpu_custom_call.1} parent=0 // pred_check
    _
  $region19: #{tpu_custom_call.1} parent=0 // pred_check_branch
    %23 = sbr.rel (0) target = $region21
  $region20: #{tpu_custom_call.1} parent=0 // pred_region
    _
  $region21: #{tpu_custom_call.1} parent=0 // pred_fallthru
    _
  // Predicated region
  $region22: #{tpu_custom_call.1} parent=0 // pred_check
    _
  $region23: #{tpu_custom_call.1} parent=0 // pred_check_branch
    %25 = sbr.rel (0) target = $region25
  $region24: #{tpu_custom_call.1} parent=0 // pred_region
    _
  $region25: #{tpu_custom_call.1} parent=0 // pred_fallthru
    _
  // Predicated region
  $region26: #{tpu_custom_call.1} parent=0 // pred_check
    _
  $region27: #{tpu_custom_call.1} parent=0 // pred_check_branch
    %27 = sbr.rel (0) target = $region29
  $region28: #{tpu_custom_call.1} parent=0 // pred_region
    _
  $region29: #{tpu_custom_call.1} parent=0 // pred_fallthru
    _
  %v28 = vld [vmem:[%s1] sm:$0xff]
  %v29 = vld [vmem:[%s1 + $0x8] sm:$0xff]
  %v30 = vld [vmem:[%s1 + $0x10] sm:$0xff]
  %v31 = vld [vmem:[%s1 + $0x18] sm:$0xff]
  %v32 = vld [vmem:[%s3] sm:$0xff]
  %v33 = vld [vmem:[%s3 + $0x8] sm:$0xff]
  %v34 = vld [vmem:[%s3 + $0x10] sm:$0xff]
  %v35 = vld [vmem:[%s3 + $0x18] sm:$0xff]
  %v36 = vld [vmem:[%s3 + $0x20] sm:$0xff]
  %v37 = vld [vmem:[%s3 + $0x28] sm:$0xff]
  %v38 = vld [vmem:[%s3 + $0x30] sm:$0xff]
  %v39 = vld [vmem:[%s3 + $0x38] sm:$0xff]
  %v40 = vld [vmem:[%s2] sm:$0x1]
  %v41 = vld [vmem:[%s4] sm:$0x1]
  %v42 = vld [vmem:[%s5] sm:$0x1]
  %v43 = vld [vmem:[#allocation2] sm:$0x1]
  %v44 = vld [vmem:[%s0] sm:$0xff]
  %v45 = vld [vmem:[%s0 + $0x8] sm:$0xff]
  %v46 = vld [vmem:[%s0 + $0x10] sm:$0xff]
  %v47 = vld [vmem:[%s0 + $0x18] sm:$0xff]
  %v48 = vld [vmem:[%s0 + $0x20] sm:$0xff]
  %v49 = vld [vmem:[%s0 + $0x28] sm:$0xff]
  %v50 = vld [vmem:[%s0 + $0x30] sm:$0xff]
  %v51 = vld [vmem:[%s0 + $0x38] sm:$0xff]
  %v52 = vld [vmem:[%s0 + $0x40] sm:$0xff]
  %v53 = vld [vmem:[%s0 + $0x48] sm:$0xff]
  %v54 = vld [vmem:[%s0 + $0x50] sm:$0xff]
  %v55 = vld [vmem:[%s0 + $0x58] sm:$0xff]
  %v56 = vld [vmem:[%s0 + $0x60] sm:$0xff]
  %v57 = vld [vmem:[%s0 + $0x68] sm:$0xff]
  %v58 = vld [vmem:[%s0 + $0x70] sm:$0xff]
  %v59 = vld [vmem:[%s0 + $0x78] sm:$0xff]
  %v61 = vlaneseq
  %v62 = vshrl.u32 %v61, 7
  %v63 = vsub.s32 0, %v62
  %v64 = vrot.slane %v40, %v63
  %vm66 = vcmask 261120
  %v68 = vsel %vm66, %v44, 0
  %v71 = vsel %vm66, %v45, 0
  %v74 = vsel %vm66, %v46, 0
  %v77 = vsel %vm66, %v47, 0
  %v80 = vsel %vm66, %v48, 0
  %v83 = vsel %vm66, %v49, 0
  %v86 = vsel %vm66, %v50, 0
  %v89 = vsel %vm66, %v51, 0
  %v92 = vsel %vm66, %v52, 0
  %v95 = vsel %vm66, %v53, 0
  %v98 = vsel %vm66, %v54, 0
  %v101 = vsel %vm66, %v55, 0
  %v104 = vsel %vm66, %v56, 0
  %v107 = vsel %vm66, %v57, 0
  %v110 = vsel %vm66, %v58, 0
  %v113 = vsel %vm66, %v59, 0
  %115 = vmatprep.subr.mxu0 0.0
  %v116 = vand.u32 %v28, 4294901760
  %117 = vmatpush1.msra.mxu0 %v116
  %118 = vmatprep.subr.mxu0 0.0
  %v119 = vand.u32 %v29, 4294901760
  %120 = vmatpush1.msra.mxu0 %v119
  %121 = vmatprep.subr.mxu0 0.0
  %v122 = vand.u32 %v30, 4294901760
  %123 = vmatpush1.msra.mxu0 %v122
  %124 = vmatprep.subr.mxu0 0.0
  %v125 = vand.u32 %v31, 4294901760
  %126 = vmatpush1.msra.mxu0 %v125
  %127 = vmatprep.subr.mxu0 0.0
  %128 = vmatpush1.msra.mxu0 0.0
  %129 = vmatprep.subr.mxu0 0.0
  %130 = vmatpush1.msra.mxu0 0.0
  %131 = vmatprep.subr.mxu0 0.0
  %132 = vmatpush1.msra.mxu0 0.0
  %133 = vmatprep.subr.mxu0 0.0
  %134 = vmatpush1.msra.mxu0 0.0
  %135 = vmatprep.subr.mxu0 0.0
  %136 = vmatpush1.msra.mxu0 0.0
  %137 = vmatprep.subr.mxu0 0.0
  %138 = vmatpush1.msra.mxu0 0.0
  %139 = vmatprep.subr.mxu0 0.0
  %140 = vmatpush1.msra.mxu0 0.0
  %141 = vmatprep.subr.mxu0 0.0
  %142 = vmatpush1.msra.mxu0 0.0
  %143 = vmatprep.subr.mxu0 0.0
  %144 = vmatpush1.msra.mxu0 0.0
  %145 = vmatprep.subr.mxu0 0.0
  %146 = vmatpush1.msra.mxu0 0.0
  %147 = vmatprep.subr.mxu0 0.0
  %148 = vmatpush1.msra.mxu0 0.0
  %149 = vmatprep.subr.mxu0 0.0
  %150 = vmatpush1.msra.mxu0 0.0
  %151 = vmatprep.subr.mxu0 0.0
  %152 = vmatpush1.msra.mxu0 0.0
  %153 = vmatprep.subr.mxu0 0.0
  %154 = vmatpush1.msra.mxu0 0.0
  %155 = vmatprep.subr.mxu0 0.0
  %156 = vmatpush1.msra.mxu0 0.0
  %157 = vmatprep.subr.mxu0 0.0
  %158 = vmatpush1.msra.mxu0 0.0
  %159 = vmatprep.subr.mxu0 0.0
  %160 = vmatpush1.msra.mxu0 0.0
  %161 = vmatprep.subr.mxu0 0.0
  %162 = vmatpush1.msra.mxu0 0.0
  %163 = vmatprep.subr.mxu0 0.0
  %164 = vmatpush1.msra.mxu0 0.0
  %165 = vmatprep.subr.mxu0 0.0
  %166 = vmatpush1.msra.mxu0 0.0
  %167 = vmatprep.subr.mxu0 0.0
  %168 = vmatpush1.msra.mxu0 0.0
  %169 = vmatprep.subr.mxu0 0.0
  %170 = vmatpush1.msra.mxu0 0.0
  %171 = vmatprep.subr.mxu0 0.0
  %172 = vmatpush1.msra.mxu0 0.0
  %173 = vmatprep.subr.mxu0 0.0
  %174 = vmatpush1.msra.mxu0 0.0
  %175 = vmatprep.subr.mxu0 0.0
  %176 = vmatpush1.msra.mxu0 0.0
  %177 = vmatprep.subr.mxu0 0.0
  %178 = vmatpush1.msra.mxu0 0.0
  %179 = vmatprep.subr.mxu0 0.0
  %180 = vmatpush1.msra.mxu0 0.0
  %181 = vmatprep.subr.mxu0 0.0
  %182 = vmatpush1.msra.mxu0 0.0
  %183 = vmatprep.mubr.f32.mxu0 0.0
  %v184 = vand.u32 %v68, 4294901760
  %v185 = vsub.f32 %v68, %v184
  %v186 = vand.u32 %v185, 4294901760
  %v187 = vsub.f32 %v185, %v186
  %v188 = vand.u32 %v187, 4294901760
  %189 = vmatmul.mubr.f32.gmra.mrb[0].mxu0 %v188
  %v190 = vpop.f32.mrb[0].mxu0
  %v191 = vadd.f32 %v64, %v190
  %v192 = vpop.f32.mrb[0].mxu0
  %193 = vmatprep.mubr.f32.mxu0 0.0
  %v194 = vand.u32 %v71, 4294901760
  %v195 = vsub.f32 %v71, %v194
  %v196 = vand.u32 %v195, 4294901760
  %v197 = vsub.f32 %v195, %v196
  %v198 = vand.u32 %v197, 4294901760
  %199 = vmatmul.mubr.f32.gmra.mrb[0].mxu0 %v198
  %v200 = vpop.f32.mrb[0].mxu0
  %v201 = vadd.f32 %v64, %v200
  %v202 = vpop.f32.mrb[0].mxu0
  %203 = vmatprep.mubr.f32.mxu0 0.0
  %v204 = vand.u32 %v74, 4294901760
  %v205 = vsub.f32 %v74, %v204
  %v206 = vand.u32 %v205, 4294901760
  %v207 = vsub.f32 %v205, %v206
  %v208 = vand.u32 %v207, 4294901760
  %209 = vmatmul.mubr.f32.gmra.mrb[0].mxu0 %v208
  %v210 = vpop.f32.mrb[0].mxu0
  %v211 = vadd.f32 %v64, %v210
  %v212 = vpop.f32.mrb[0].mxu0
  %213 = vmatprep.mubr.f32.mxu0 0.0
  %v214 = vand.u32 %v77, 4294901760
  %v215 = vsub.f32 %v77, %v214
  %v216 = vand.u32 %v215, 4294901760
  %v217 = vsub.f32 %v215, %v216
  %v218 = vand.u32 %v217, 4294901760
  %219 = vmatmul.mubr.f32.gmra.mrb[0].mxu0 %v218
  %v220 = vpop.f32.mrb[0].mxu0
  %v221 = vadd.f32 %v64, %v220
  %v222 = vpop.f32.mrb[0].mxu0
  %223 = vmatprep.mubr.f32.mxu0 0.0
  %v224 = vand.u32 %v80, 4294901760
  %v225 = vsub.f32 %v80, %v224
  %v226 = vand.u32 %v225, 4294901760
  %v227 = vsub.f32 %v225, %v226
  %v228 = vand.u32 %v227, 4294901760
  %229 = vmatmul.mubr.f32.gmra.mrb[0].mxu0 %v228
  %v230 = vpop.f32.mrb[0].mxu0
  %v231 = vadd.f32 %v64, %v230
  %v232 = vpop.f32.mrb[0].mxu0
  %233 = vmatprep.mubr.f32.mxu0 0.0
  %v234 = vand.u32 %v83, 4294901760
  %v235 = vsub.f32 %v83, %v234
  %v236 = vand.u32 %v235, 4294901760
  %v237 = vsub.f32 %v235, %v236
  %v238 = vand.u32 %v237, 4294901760
  %239 = vmatmul.mubr.f32.gmra.mrb[0].mxu0 %v238
  %v240 = vpop.f32.mrb[0].mxu0
  %v241 = vadd.f32 %v64, %v240
  %v242 = vpop.f32.mrb[0].mxu0
  %243 = vmatprep.mubr.f32.mxu0 0.0
  %v244 = vand.u32 %v86, 4294901760
  %v245 = vsub.f32 %v86, %v244
  %v246 = vand.u32 %v245, 4294901760
  %v247 = vsub.f32 %v245, %v246
  %v248 = vand.u32 %v247, 4294901760
  %249 = vmatmul.mubr.f32.gmra.mrb[0].mxu0 %v248
  %v250 = vpop.f32.mrb[0].mxu0
  %v251 = vadd.f32 %v64, %v250
  %v252 = vpop.f32.mrb[0].mxu0
  %253 = vmatprep.mubr.f32.mxu0 0.0
  %v254 = vand.u32 %v89, 4294901760
  %v255 = vsub.f32 %v89, %v254
  %v256 = vand.u32 %v255, 4294901760
  %v257 = vsub.f32 %v255, %v256
  %v258 = vand.u32 %v257, 4294901760
  %259 = vmatmul.mubr.f32.gmra.mrb[0].mxu0 %v258
  %v260 = vpop.f32.mrb[0].mxu0
  %v261 = vadd.f32 %v64, %v260
  %v262 = vpop.f32.mrb[0].mxu0
  %263 = vmatprep.mubr.f32.mxu0 0.0
  %v264 = vand.u32 %v92, 4294901760
  %v265 = vsub.f32 %v92, %v264
  %v266 = vand.u32 %v265, 4294901760
  %v267 = vsub.f32 %v265, %v266
  %v268 = vand.u32 %v267, 4294901760
  %269 = vmatmul.mubr.f32.gmra.mrb[0].mxu0 %v268
  %v270 = vpop.f32.mrb[0].mxu0
  %v271 = vadd.f32 %v64, %v270
  %v272 = vpop.f32.mrb[0].mxu0
  %273 = vmatprep.mubr.f32.mxu0 0.0
  %v274 = vand.u32 %v95, 4294901760
  %v275 = vsub.f32 %v95, %v274
  %v276 = vand.u32 %v275, 4294901760
  %v277 = vsub.f32 %v275, %v276
  %v278 = vand.u32 %v277, 4294901760
  %279 = vmatmul.mubr.f32.gmra.mrb[0].mxu0 %v278
  %v280 = vpop.f32.mrb[0].mxu0
  %v281 = vadd.f32 %v64, %v280
  %v282 = vpop.f32.mrb[0].mxu0
  %283 = vmatprep.mubr.f32.mxu0 0.0
  %v284 = vand.u32 %v98, 4294901760
  %v285 = vsub.f32 %v98, %v284
  %v286 = vand.u32 %v285, 4294901760
  %v287 = vsub.f32 %v285, %v286
  %v288 = vand.u32 %v287, 4294901760
  %289 = vmatmul.mubr.f32.gmra.mrb[0].mxu0 %v288
  %v290 = vpop.f32.mrb[0].mxu0
  %v291 = vadd.f32 %v64, %v290
  %v292 = vpop.f32.mrb[0].mxu0
  %293 = vmatprep.mubr.f32.mxu0 0.0
  %v294 = vand.u32 %v101, 4294901760
  %v295 = vsub.f32 %v101, %v294
  %v296 = vand.u32 %v295, 4294901760
  %v297 = vsub.f32 %v295, %v296
  %v298 = vand.u32 %v297, 4294901760
  %299 = vmatmul.mubr.f32.gmra.mrb[0].mxu0 %v298
  %v300 = vpop.f32.mrb[0].mxu0
  %v301 = vadd.f32 %v64, %v300
  %v302 = vpop.f32.mrb[0].mxu0
  %303 = vmatprep.mubr.f32.mxu0 0.0
  %v304 = vand.u32 %v104, 4294901760
  %v305 = vsub.f32 %v104, %v304
  %v306 = vand.u32 %v305, 4294901760
  %v307 = vsub.f32 %v305, %v306
  %v308 = vand.u32 %v307, 4294901760
  %309 = vmatmul.mubr.f32.gmra.mrb[0].mxu0 %v308
  %v310 = vpop.f32.mrb[0].mxu0
  %v311 = vadd.f32 %v64, %v310
  %v312 = vpop.f32.mrb[0].mxu0
  %313 = vmatprep.mubr.f32.mxu0 0.0
  %v314 = vand.u32 %v107, 4294901760
  %v315 = vsub.f32 %v107, %v314
  %v316 = vand.u32 %v315, 4294901760
  %v317 = vsub.f32 %v315, %v316
  %v318 = vand.u32 %v317, 4294901760
  %319 = vmatmul.mubr.f32.gmra.mrb[0].mxu0 %v318
  %v320 = vpop.f32.mrb[0].mxu0
  %v321 = vadd.f32 %v64, %v320
  %v322 = vpop.f32.mrb[0].mxu0
  %323 = vmatprep.mubr.f32.mxu0 0.0
  %v324 = vand.u32 %v110, 4294901760
  %v325 = vsub.f32 %v110, %v324
  %v326 = vand.u32 %v325, 4294901760
  %v327 = vsub.f32 %v325, %v326
  %v328 = vand.u32 %v327, 4294901760
  %329 = vmatmul.mubr.f32.gmra.mrb[0].mxu0 %v328
  %v330 = vpop.f32.mrb[0].mxu0
  %v331 = vadd.f32 %v64, %v330
  %v332 = vpop.f32.mrb[0].mxu0
  %333 = vmatprep.mubr.f32.mxu0 0.0
  %v334 = vand.u32 %v113, 4294901760
  %v335 = vsub.f32 %v113, %v334
  %v336 = vand.u32 %v335, 4294901760
  %v337 = vsub.f32 %v335, %v336
  %v338 = vand.u32 %v337, 4294901760
  %339 = vmatmul.mubr.f32.gmra.mrb[0].mxu0 %v338
  %v340 = vpop.f32.mrb[0].mxu0
  %v341 = vadd.f32 %v64, %v340
  %v342 = vpop.f32.mrb[0].mxu0
  %343 = vdwg.mxu0
  %344 = vmatprep.subr.mxu0 0.0
  %v345 = vand.u32 %v28, 4294901760
  %v346 = vsub.f32 %v28, %v345
  %v347 = vand.u32 %v346, 4294901760
  %v348 = vsub.f32 %v346, %v347
  %v349 = vand.u32 %v348, 4294901760
  %350 = vmatpush1.msra.mxu0 %v349
  %351 = vmatprep.subr.mxu0 0.0
  %v352 = vand.u32 %v29, 4294901760
  %v353 = vsub.f32 %v29, %v352
  %v354 = vand.u32 %v353, 4294901760
  %v355 = vsub.f32 %v353, %v354
  %v356 = vand.u32 %v355, 4294901760
  %357 = vmatpush1.msra.mxu0 %v356
  %358 = vmatprep.subr.mxu0 0.0
  %v359 = vand.u32 %v30, 4294901760
  %v360 = vsub.f32 %v30, %v359
  %v361 = vand.u32 %v360, 4294901760
  %v362 = vsub.f32 %v360, %v361
  %v363 = vand.u32 %v362, 4294901760
  %364 = vmatpush1.msra.mxu0 %v363
  %365 = vmatprep.subr.mxu0 0.0
  %v366 = vand.u32 %v31, 4294901760
  %v367 = vsub.f32 %v31, %v366
  %v368 = vand.u32 %v367, 4294901760
  %v369 = vsub.f32 %v367, %v368
  %v370 = vand.u32 %v369, 4294901760
  %371 = vmatpush1.msra.mxu0 %v370
  %372 = vmatprep.subr.mxu0 0.0
  %373 = vmatpush1.msra.mxu0 0.0
  %374 = vmatprep.subr.mxu0 0.0
  %375 = vmatpush1.msra.mxu0 0.0
  %376 = vmatprep.subr.mxu0 0.0
  %377 = vmatpush1.msra.mxu0 0.0
  %378 = vmatprep.subr.mxu0 0.0
  %379 = vmatpush1.msra.mxu0 0.0
  %380 = vmatprep.subr.mxu0 0.0
  %381 = vmatpush1.msra.mxu0 0.0
  %382 = vmatprep.subr.mxu0 0.0
  %383 = vmatpush1.msra.mxu0 0.0
  %384 = vmatprep.subr.mxu0 0.0
  %385 = vmatpush1.msra.mxu0 0.0
  %386 = vmatprep.subr.mxu0 0.0
  %387 = vmatpush1.msra.mxu0 0.0
  %388 = vmatprep.subr.mxu0 0.0
  %389 = vmatpush1.msra.mxu0 0.0
  %390 = vmatprep.subr.mxu0 0.0
  %391 = vmatpush1.msra.mxu0 0.0
  %392 = vmatprep.subr.mxu0 0.0
  %393 = vmatpush1.msra.mxu0 0.0
  %394 = vmatprep.subr.mxu0 0.0
  %395 = vmatpush1.msra.mxu0 0.0
  %396 = vmatprep.subr.mxu0 0.0
  %397 = vmatpush1.msra.mxu0 0.0
  %398 = vmatprep.subr.mxu0 0.0
  %399 = vmatpush1.msra.mxu0 0.0
  %400 = vmatprep.subr.mxu0 0.0
  %401 = vmatpush1.msra.mxu0 0.0
  %402 = vmatprep.subr.mxu0 0.0
  %403 = vmatpush1.msra.mxu0 0.0
  %404 = vmatprep.subr.mxu0 0.0
  %405 = vmatpush1.msra.mxu0 0.0
  %406 = vmatprep.subr.mxu0 0.0
  %407 = vmatpush1.msra.mxu0 0.0
  %408 = vmatprep.subr.mxu0 0.0
  %409 = vmatpush1.msra.mxu0 0.0
  %410 = vmatprep.subr.mxu0 0.0
  %411 = vmatpush1.msra.mxu0 0.0
  %412 = vmatprep.subr.mxu0 0.0
  %413 = vmatpush1.msra.mxu0 0.0
  %414 = vmatprep.subr.mxu0 0.0
  %415 = vmatpush1.msra.mxu0 0.0
  %416 = vmatprep.subr.mxu0 0.0
  %417 = vmatpush1.msra.mxu0 0.0
  %418 = vmatprep.subr.mxu0 0.0
  %419 = vmatpush1.msra.mxu0 0.0
  %420 = vmatprep.subr.mxu0 0.0
  %421 = vmatpush1.msra.mxu0 0.0
  %422 = vmatprep.subr.mxu0 0.0
  %423 = vmatpush1.msra.mxu0 0.0
  %424 = vmatprep.subr.mxu0 0.0
  %425 = vmatpush1.msra.mxu0 0.0
  %426 = vmatprep.subr.mxu0 0.0
  %427 = vmatpush1.msra.mxu0 0.0
  %428 = vmatprep.mubr.f32.mxu0 0.0
  %v429 = vand.u32 %v68, 4294901760
  %430 = vmatmul.mubr.f32.gmra.mrb[0].mxu0 %v429
  %v431 = vpop.f32.mrb[0].mxu0
  %v432 = vadd.f32 %v191, %v431
  %v433 = vpop.f32.mrb[0].mxu0
  %434 = vmatprep.mubr.f32.mxu0 0.0
  %v435 = vand.u32 %v71, 4294901760
  %436 = vmatmul.mubr.f32.gmra.mrb[0].mxu0 %v435
  %v437 = vpop.f32.mrb[0].mxu0
  %v438 = vadd.f32 %v201, %v437
  %v439 = vpop.f32.mrb[0].mxu0
  %440 = vmatprep.mubr.f32.mxu0 0.0
  %v441 = vand.u32 %v74, 4294901760
  %442 = vmatmul.mubr.f32.gmra.mrb[0].mxu0 %v441
  %v443 = vpop.f32.mrb[0].mxu0
  %v444 = vadd.f32 %v211, %v443
  %v445 = vpop.f32.mrb[0].mxu0
  %446 = vmatprep.mubr.f32.mxu0 0.0
  %v447 = vand.u32 %v77, 4294901760
  %448 = vmatmul.mubr.f32.gmra.mrb[0].mxu0 %v447
  %v449 = vpop.f32.mrb[0].mxu0
  %v450 = vadd.f32 %v221, %v449
  %v451 = vpop.f32.mrb[0].mxu0
  %452 = vmatprep.mubr.f32.mxu0 0.0
  %v453 = vand.u32 %v80, 4294901760
  %454 = vmatmul.mubr.f32.gmra.mrb[0].mxu0 %v453
  %v455 = vpop.f32.mrb[0].mxu0
  %v456 = vadd.f32 %v231, %v455
  %v457 = vpop.f32.mrb[0].mxu0
  %458 = vmatprep.mubr.f32.mxu0 0.0
  %v459 = vand.u32 %v83, 4294901760
  %460 = vmatmul.mubr.f32.gmra.mrb[0].mxu0 %v459
  %v461 = vpop.f32.mrb[0].mxu0
  %v462 = vadd.f32 %v241, %v461
  %v463 = vpop.f32.mrb[0].mxu0
  %464 = vmatprep.mubr.f32.mxu0 0.0
  %v465 = vand.u32 %v86, 4294901760
  %466 = vmatmul.mubr.f32.gmra.mrb[0].mxu0 %v465
  %v467 = vpop.f32.mrb[0].mxu0
  %v468 = vadd.f32 %v251, %v467
  %v469 = vpop.f32.mrb[0].mxu0
  %470 = vmatprep.mubr.f32.mxu0 0.0
  %v471 = vand.u32 %v89, 4294901760
  %472 = vmatmul.mubr.f32.gmra.mrb[0].mxu0 %v471
  %v473 = vpop.f32.mrb[0].mxu0
  %v474 = vadd.f32 %v261, %v473
  %v475 = vpop.f32.mrb[0].mxu0
  %476 = vmatprep.mubr.f32.mxu0 0.0
  %v477 = vand.u32 %v92, 4294901760
  %478 = vmatmul.mubr.f32.gmra.mrb[0].mxu0 %v477
  %v479 = vpop.f32.mrb[0].mxu0
  %v480 = vadd.f32 %v271, %v479
  %v481 = vpop.f32.mrb[0].mxu0
  %482 = vmatprep.mubr.f32.mxu0 0.0
  %v483 = vand.u32 %v95, 4294901760
  %484 = vmatmul.mubr.f32.gmra.mrb[0].mxu0 %v483
  %v485 = vpop.f32.mrb[0].mxu0
  %v486 = vadd.f32 %v281, %v485
  %v487 = vpop.f32.mrb[0].mxu0
  %488 = vmatprep.mubr.f32.mxu0 0.0
  %v489 = vand.u32 %v98, 4294901760
  %490 = vmatmul.mubr.f32.gmra.mrb[0].mxu0 %v489
  %v491 = vpop.f32.mrb[0].mxu0
  %v492 = vadd.f32 %v291, %v491
  %v493 = vpop.f32.mrb[0].mxu0
  %494 = vmatprep.mubr.f32.mxu0 0.0
  %v495 = vand.u32 %v101, 4294901760
  %496 = vmatmul.mubr.f32.gmra.mrb[0].mxu0 %v495
  %v497 = vpop.f32.mrb[0].mxu0
  %v498 = vadd.f32 %v301, %v497
  %v499 = vpop.f32.mrb[0].mxu0
  %500 = vmatprep.mubr.f32.mxu0 0.0
  %v501 = vand.u32 %v104, 4294901760
  %502 = vmatmul.mubr.f32.gmra.mrb[0].mxu0 %v501
  %v503 = vpop.f32.mrb[0].mxu0
  %v504 = vadd.f32 %v311, %v503
  %v505 = vpop.f32.mrb[0].mxu0
  %506 = vmatprep.mubr.f32.mxu0 0.0
  %v507 = vand.u32 %v107, 4294901760
  %508 = vmatmul.mubr.f32.gmra.mrb[0].mxu0 %v507
  %v509 = vpop.f32.mrb[0].mxu0
  %v510 = vadd.f32 %v321, %v509
  %v511 = vpop.f32.mrb[0].mxu0
  %512 = vmatprep.mubr.f32.mxu0 0.0
  %v513 = vand.u32 %v110, 4294901760
  %514 = vmatmul.mubr.f32.gmra.mrb[0].mxu0 %v513
  %v515 = vpop.f32.mrb[0].mxu0
  %v516 = vadd.f32 %v331, %v515
  %v517 = vpop.f32.mrb[0].mxu0
  %518 = vmatprep.mubr.f32.mxu0 0.0
  %v519 = vand.u32 %v113, 4294901760
  %520 = vmatmul.mubr.f32.gmra.mrb[0].mxu0 %v519
  %v521 = vpop.f32.mrb[0].mxu0
  %v522 = vadd.f32 %v341, %v521
  %v523 = vpop.f32.mrb[0].mxu0
  %524 = vdwg.mxu0
  %525 = vmatprep.subr.mxu0 0.0
  %v526 = vand.u32 %v28, 4294901760
  %v527 = vsub.f32 %v28, %v526
  %528 = vmatpush1.msra.mxu0 %v527
  %529 = vmatprep.subr.mxu0 0.0
  %v530 = vand.u32 %v29, 4294901760
  %v531 = vsub.f32 %v29, %v530
  %532 = vmatpush1.msra.mxu0 %v531
  %533 = vmatprep.subr.mxu0 0.0
  %v534 = vand.u32 %v30, 4294901760
  %v535 = vsub.f32 %v30, %v534
  %536 = vmatpush1.msra.mxu0 %v535
  %537 = vmatprep.subr.mxu0 0.0
  %v538 = vand.u32 %v31, 4294901760
  %v539 = vsub.f32 %v31, %v538
  %540 = vmatpush1.msra.mxu0 %v539
  %541 = vmatprep.subr.mxu0 0.0
  %542 = vmatpush1.msra.mxu0 0.0
  %543 = vmatprep.subr.mxu0 0.0
  %544 = vmatpush1.msra.mxu0 0.0
  %545 = vmatprep.subr.mxu0 0.0
  %546 = vmatpush1.msra.mxu0 0.0
  %547 = vmatprep.subr.mxu0 0.0
  %548 = vmatpush1.msra.mxu0 0.0
  %549 = vmatprep.subr.mxu0 0.0
  %550 = vmatpush1.msra.mxu0 0.0
  %551 = vmatprep.subr.mxu0 0.0
  %552 = vmatpush1.msra.mxu0 0.0
  %553 = vmatprep.subr.mxu0 0.0
  %554 = vmatpush1.msra.mxu0 0.0
  %555 = vmatprep.subr.mxu0 0.0
  %556 = vmatpush1.msra.mxu0 0.0
  %557 = vmatprep.subr.mxu0 0.0
  %558 = vmatpush1.msra.mxu0 0.0
  %559 = vmatprep.subr.mxu0 0.0
  %560 = vmatpush1.msra.mxu0 0.0
  %561 = vmatprep.subr.mxu0 0.0
  %562 = vmatpush1.msra.mxu0 0.0
  %563 = vmatprep.subr.mxu0 0.0
  %564 = vmatpush1.msra.mxu0 0.0
  %565 = vmatprep.subr.mxu0 0.0
  %566 = vmatpush1.msra.mxu0 0.0
  %567 = vmatprep.subr.mxu0 0.0
  %568 = vmatpush1.msra.mxu0 0.0
  %569 = vmatprep.subr.mxu0 0.0
  %570 = vmatpush1.msra.mxu0 0.0
  %571 = vmatprep.subr.mxu0 0.0
  %572 = vmatpush1.msra.mxu0 0.0
  %573 = vmatprep.subr.mxu0 0.0
  %574 = vmatpush1.msra.mxu0 0.0
  %575 = vmatprep.subr.mxu0 0.0
  %576 = vmatpush1.msra.mxu0 0.0
  %577 = vmatprep.subr.mxu0 0.0
  %578 = vmatpush1.msra.mxu0 0.0
  %579 = vmatprep.subr.mxu0 0.0
  %580 = vmatpush1.msra.mxu0 0.0
  %581 = vmatprep.subr.mxu0 0.0
  %582 = vmatpush1.msra.mxu0 0.0
  %583 = vmatprep.subr.mxu0 0.0
  %584 = vmatpush1.msra.mxu0 0.0
  %585 = vmatprep.subr.mxu0 0.0
  %586 = vmatpush1.msra.mxu0 0.0
  %587 = vmatprep.subr.mxu0 0.0
  %588 = vmatpush1.msra.mxu0 0.0
  %589 = vmatprep.subr.mxu0 0.0
  %590 = vmatpush1.msra.mxu0 0.0
  %591 = vmatprep.subr.mxu0 0.0
  %592 = vmatpush1.msra.mxu0 0.0
  %593 = vmatprep.subr.mxu0 0.0
  %594 = vmatpush1.msra.mxu0 0.0
  %595 = vmatprep.subr.mxu0 0.0
  %596 = vmatpush1.msra.mxu0 0.0
  %597 = vmatprep.mubr.f32.mxu0 0.0
  %v598 = vand.u32 %v68, 4294901760
  %v599 = vsub.f32 %v68, %v598
  %600 = vmatmul.mubr.f32.gmra.mrb[0].mxu0 %v599
  %v601 = vpop.f32.mrb[0].mxu0
  %v602 = vadd.f32 %v432, %v601
  %v603 = vpop.f32.mrb[0].mxu0
  %604 = vmatprep.mubr.f32.mxu0 0.0
  %v605 = vand.u32 %v71, 4294901760
  %v606 = vsub.f32 %v71, %v605
  %607 = vmatmul.mubr.f32.gmra.mrb[0].mxu0 %v606
  %v608 = vpop.f32.mrb[0].mxu0
  %v609 = vadd.f32 %v438, %v608
  %v610 = vpop.f32.mrb[0].mxu0
  %611 = vmatprep.mubr.f32.mxu0 0.0
  %v612 = vand.u32 %v74, 4294901760
  %v613 = vsub.f32 %v74, %v612
  %614 = vmatmul.mubr.f32.gmra.mrb[0].mxu0 %v613
  %v615 = vpop.f32.mrb[0].mxu0
  %v616 = vadd.f32 %v444, %v615
  %v617 = vpop.f32.mrb[0].mxu0
  %618 = vmatprep.mubr.f32.mxu0 0.0
  %v619 = vand.u32 %v77, 4294901760
  %v620 = vsub.f32 %v77, %v619
  %621 = vmatmul.mubr.f32.gmra.mrb[0].mxu0 %v620
  %v622 = vpop.f32.mrb[0].mxu0
  %v623 = vadd.f32 %v450, %v622
  %v624 = vpop.f32.mrb[0].mxu0
  %625 = vmatprep.mubr.f32.mxu0 0.0
  %v626 = vand.u32 %v80, 4294901760
  %v627 = vsub.f32 %v80, %v626
  %628 = vmatmul.mubr.f32.gmra.mrb[0].mxu0 %v627
  %v629 = vpop.f32.mrb[0].mxu0
  %v630 = vadd.f32 %v456, %v629
  %v631 = vpop.f32.mrb[0].mxu0
  %632 = vmatprep.mubr.f32.mxu0 0.0
  %v633 = vand.u32 %v83, 4294901760
  %v634 = vsub.f32 %v83, %v633
  %635 = vmatmul.mubr.f32.gmra.mrb[0].mxu0 %v634
  %v636 = vpop.f32.mrb[0].mxu0
  %v637 = vadd.f32 %v462, %v636
  %v638 = vpop.f32.mrb[0].mxu0
  %639 = vmatprep.mubr.f32.mxu0 0.0
  %v640 = vand.u32 %v86, 4294901760
  %v641 = vsub.f32 %v86, %v640
  %642 = vmatmul.mubr.f32.gmra.mrb[0].mxu0 %v641
  %v643 = vpop.f32.mrb[0].mxu0
  %v644 = vadd.f32 %v468, %v643
  %v645 = vpop.f32.mrb[0].mxu0
  %646 = vmatprep.mubr.f32.mxu0 0.0
  %v647 = vand.u32 %v89, 4294901760
  %v648 = vsub.f32 %v89, %v647
  %649 = vmatmul.mubr.f32.gmra.mrb[0].mxu0 %v648
  %v650 = vpop.f32.mrb[0].mxu0
  %v651 = vadd.f32 %v474, %v650
  %v652 = vpop.f32.mrb[0].mxu0
  %653 = vmatprep.mubr.f32.mxu0 0.0
  %v654 = vand.u32 %v92, 4294901760
  %v655 = vsub.f32 %v92, %v654
  %656 = vmatmul.mubr.f32.gmra.mrb[0].mxu0 %v655
  %v657 = vpop.f32.mrb[0].mxu0
  %v658 = vadd.f32 %v480, %v657
  %v659 = vpop.f32.mrb[0].mxu0
  %660 = vmatprep.mubr.f32.mxu0 0.0
  %v661 = vand.u32 %v95, 4294901760
  %v662 = vsub.f32 %v95, %v661
  %663 = vmatmul.mubr.f32.gmra.mrb[0].mxu0 %v662
  %v664 = vpop.f32.mrb[0].mxu0
  %v665 = vadd.f32 %v486, %v664
  %v666 = vpop.f32.mrb[0].mxu0
  %667 = vmatprep.mubr.f32.mxu0 0.0
  %v668 = vand.u32 %v98, 4294901760
  %v669 = vsub.f32 %v98, %v668
  %670 = vmatmul.mubr.f32.gmra.mrb[0].mxu0 %v669
  %v671 = vpop.f32.mrb[0].mxu0
  %v672 = vadd.f32 %v492, %v671
  %v673 = vpop.f32.mrb[0].mxu0
  %674 = vmatprep.mubr.f32.mxu0 0.0
  %v675 = vand.u32 %v101, 4294901760
  %v676 = vsub.f32 %v101, %v675
  %677 = vmatmul.mubr.f32.gmra.mrb[0].mxu0 %v676
  %v678 = vpop.f32.mrb[0].mxu0
  %v679 = vadd.f32 %v498, %v678
  %v680 = vpop.f32.mrb[0].mxu0
  %681 = vmatprep.mubr.f32.mxu0 0.0
  %v682 = vand.u32 %v104, 4294901760
  %v683 = vsub.f32 %v104, %v682
  %684 = vmatmul.mubr.f32.gmra.mrb[0].mxu0 %v683
  %v685 = vpop.f32.mrb[0].mxu0
  %v686 = vadd.f32 %v504, %v685
  %v687 = vpop.f32.mrb[0].mxu0
  %688 = vmatprep.mubr.f32.mxu0 0.0
  %v689 = vand.u32 %v107, 4294901760
  %v690 = vsub.f32 %v107, %v689
  %691 = vmatmul.mubr.f32.gmra.mrb[0].mxu0 %v690
  %v692 = vpop.f32.mrb[0].mxu0
  %v693 = vadd.f32 %v510, %v692
  %v694 = vpop.f32.mrb[0].mxu0
  %695 = vmatprep.mubr.f32.mxu0 0.0
  %v696 = vand.u32 %v110, 4294901760
  %v697 = vsub.f32 %v110, %v696
  %698 = vmatmul.mubr.f32.gmra.mrb[0].mxu0 %v697
  %v699 = vpop.f32.mrb[0].mxu0
  %v700 = vadd.f32 %v516, %v699
  %v701 = vpop.f32.mrb[0].mxu0
  %702 = vmatprep.mubr.f32.mxu0 0.0
  %v703 = vand.u32 %v113, 4294901760
  %v704 = vsub.f32 %v113, %v703
  %705 = vmatmul.mubr.f32.gmra.mrb[0].mxu0 %v704
  %v706 = vpop.f32.mrb[0].mxu0
  %v707 = vadd.f32 %v522, %v706
  %v708 = vpop.f32.mrb[0].mxu0
  %709 = vdwg.mxu0
  %710 = vmatprep.subr.mxu0 0.0
  %v711 = vand.u32 %v28, 4294901760
  %712 = vmatpush1.msra.mxu0 %v711
  %713 = vmatprep.subr.mxu0 0.0
  %v714 = vand.u32 %v29, 4294901760
  %715 = vmatpush1.msra.mxu0 %v714
  %716 = vmatprep.subr.mxu0 0.0
  %v717 = vand.u32 %v30, 4294901760
  %718 = vmatpush1.msra.mxu0 %v717
  %719 = vmatprep.subr.mxu0 0.0
  %v720 = vand.u32 %v31, 4294901760
  %721 = vmatpush1.msra.mxu0 %v720
  %722 = vmatprep.subr.mxu0 0.0
  %723 = vmatpush1.msra.mxu0 0.0
  %724 = vmatprep.subr.mxu0 0.0
  %725 = vmatpush1.msra.mxu0 0.0
  %726 = vmatprep.subr.mxu0 0.0
  %727 = vmatpush1.msra.mxu0 0.0
  %728 = vmatprep.subr.mxu0 0.0
  %729 = vmatpush1.msra.mxu0 0.0
  %730 = vmatprep.subr.mxu0 0.0
  %731 = vmatpush1.msra.mxu0 0.0
  %732 = vmatprep.subr.mxu0 0.0
  %733 = vmatpush1.msra.mxu0 0.0
  %734 = vmatprep.subr.mxu0 0.0
  %735 = vmatpush1.msra.mxu0 0.0
  %736 = vmatprep.subr.mxu0 0.0
  %737 = vmatpush1.msra.mxu0 0.0
  %738 = vmatprep.subr.mxu0 0.0
  %739 = vmatpush1.msra.mxu0 0.0
  %740 = vmatprep.subr.mxu0 0.0
  %741 = vmatpush1.msra.mxu0 0.0
  %742 = vmatprep.subr.mxu0 0.0
  %743 = vmatpush1.msra.mxu0 0.0
  %744 = vmatprep.subr.mxu0 0.0
  %745 = vmatpush1.msra.mxu0 0.0
  %746 = vmatprep.subr.mxu0 0.0
  %747 = vmatpush1.msra.mxu0 0.0
  %748 = vmatprep.subr.mxu0 0.0
  %749 = vmatpush1.msra.mxu0 0.0
  %750 = vmatprep.subr.mxu0 0.0
  %751 = vmatpush1.msra.mxu0 0.0
  %752 = vmatprep.subr.mxu0 0.0
  %753 = vmatpush1.msra.mxu0 0.0
  %754 = vmatprep.subr.mxu0 0.0
  %755 = vmatpush1.msra.mxu0 0.0
  %756 = vmatprep.subr.mxu0 0.0
  %757 = vmatpush1.msra.mxu0 0.0
  %758 = vmatprep.subr.mxu0 0.0
  %759 = vmatpush1.msra.mxu0 0.0
  %760 = vmatprep.subr.mxu0 0.0
  %761 = vmatpush1.msra.mxu0 0.0
  %762 = vmatprep.subr.mxu0 0.0
  %763 = vmatpush1.msra.mxu0 0.0
  %764 = vmatprep.subr.mxu0 0.0
  %765 = vmatpush1.msra.mxu0 0.0
  %766 = vmatprep.subr.mxu0 0.0
  %767 = vmatpush1.msra.mxu0 0.0
  %768 = vmatprep.subr.mxu0 0.0
  %769 = vmatpush1.msra.mxu0 0.0
  %770 = vmatprep.subr.mxu0 0.0
  %771 = vmatpush1.msra.mxu0 0.0
  %772 = vmatprep.subr.mxu0 0.0
  %773 = vmatpush1.msra.mxu0 0.0
  %774 = vmatprep.subr.mxu0 0.0
  %775 = vmatpush1.msra.mxu0 0.0
  %776 = vmatprep.subr.mxu0 0.0
  %777 = vmatpush1.msra.mxu0 0.0
  %778 = vmatprep.mubr.f32.mxu0 0.0
  %v779 = vand.u32 %v68, 4294901760
  %v780 = vsub.f32 %v68, %v779
  %v781 = vand.u32 %v780, 4294901760
  %782 = vmatmul.mubr.f32.gmra.mrb[0].mxu0 %v781
  %v783 = vpop.f32.mrb[0].mxu0
  %v784 = vadd.f32 %v602, %v783
  %v785 = vpop.f32.mrb[0].mxu0
  %786 = vmatprep.mubr.f32.mxu0 0.0
  %v787 = vand.u32 %v71, 4294901760
  %v788 = vsub.f32 %v71, %v787
  %v789 = vand.u32 %v788, 4294901760
  %790 = vmatmul.mubr.f32.gmra.mrb[0].mxu0 %v789
  %v791 = vpop.f32.mrb[0].mxu0
  %v792 = vadd.f32 %v609, %v791
  %v793 = vpop.f32.mrb[0].mxu0
  %794 = vmatprep.mubr.f32.mxu0 0.0
  %v795 = vand.u32 %v74, 4294901760
  %v796 = vsub.f32 %v74, %v795
  %v797 = vand.u32 %v796, 4294901760
  %798 = vmatmul.mubr.f32.gmra.mrb[0].mxu0 %v797
  %v799 = vpop.f32.mrb[0].mxu0
  %v800 = vadd.f32 %v616, %v799
  %v801 = vpop.f32.mrb[0].mxu0
  %802 = vmatprep.mubr.f32.mxu0 0.0
  %v803 = vand.u32 %v77, 4294901760
  %v804 = vsub.f32 %v77, %v803
  %v805 = vand.u32 %v804, 4294901760
  %806 = vmatmul.mubr.f32.gmra.mrb[0].mxu0 %v805
  %v807 = vpop.f32.mrb[0].mxu0
  %v808 = vadd.f32 %v623, %v807
  %v809 = vpop.f32.mrb[0].mxu0
  %810 = vmatprep.mubr.f32.mxu0 0.0
  %v811 = vand.u32 %v80, 4294901760
  %v812 = vsub.f32 %v80, %v811
  %v813 = vand.u32 %v812, 4294901760
  %814 = vmatmul.mubr.f32.gmra.mrb[0].mxu0 %v813
  %v815 = vpop.f32.mrb[0].mxu0
  %v816 = vadd.f32 %v630, %v815
  %v817 = vpop.f32.mrb[0].mxu0
  %818 = vmatprep.mubr.f32.mxu0 0.0
  %v819 = vand.u32 %v83, 4294901760
  %v820 = vsub.f32 %v83, %v819
  %v821 = vand.u32 %v820, 4294901760
  %822 = vmatmul.mubr.f32.gmra.mrb[0].mxu0 %v821
  %v823 = vpop.f32.mrb[0].mxu0
  %v824 = vadd.f32 %v637, %v823
  %v825 = vpop.f32.mrb[0].mxu0
  %826 = vmatprep.mubr.f32.mxu0 0.0
  %v827 = vand.u32 %v86, 4294901760
  %v828 = vsub.f32 %v86, %v827
  %v829 = vand.u32 %v828, 4294901760
  %830 = vmatmul.mubr.f32.gmra.mrb[0].mxu0 %v829
  %v831 = vpop.f32.mrb[0].mxu0
  %v832 = vadd.f32 %v644, %v831
  %v833 = vpop.f32.mrb[0].mxu0
  %834 = vmatprep.mubr.f32.mxu0 0.0
  %v835 = vand.u32 %v89, 4294901760
  %v836 = vsub.f32 %v89, %v835
  %v837 = vand.u32 %v836, 4294901760
  %838 = vmatmul.mubr.f32.gmra.mrb[0].mxu0 %v837
  %v839 = vpop.f32.mrb[0].mxu0
  %v840 = vadd.f32 %v651, %v839
  %v841 = vpop.f32.mrb[0].mxu0
  %842 = vmatprep.mubr.f32.mxu0 0.0
  %v843 = vand.u32 %v92, 4294901760
  %v844 = vsub.f32 %v92, %v843
  %v845 = vand.u32 %v844, 4294901760
  %846 = vmatmul.mubr.f32.gmra.mrb[0].mxu0 %v845
  %v847 = vpop.f32.mrb[0].mxu0
  %v848 = vadd.f32 %v658, %v847
  %v849 = vpop.f32.mrb[0].mxu0
  %850 = vmatprep.mubr.f32.mxu0 0.0
  %v851 = vand.u32 %v95, 4294901760
  %v852 = vsub.f32 %v95, %v851
  %v853 = vand.u32 %v852, 4294901760
  %854 = vmatmul.mubr.f32.gmra.mrb[0].mxu0 %v853
  %v855 = vpop.f32.mrb[0].mxu0
  %v856 = vadd.f32 %v665, %v855
  %v857 = vpop.f32.mrb[0].mxu0
  %858 = vmatprep.mubr.f32.mxu0 0.0
  %v859 = vand.u32 %v98, 4294901760
  %v860 = vsub.f32 %v98, %v859
  %v861 = vand.u32 %v860, 4294901760
  %862 = vmatmul.mubr.f32.gmra.mrb[0].mxu0 %v861
  %v863 = vpop.f32.mrb[0].mxu0
  %v864 = vadd.f32 %v672, %v863
  %v865 = vpop.f32.mrb[0].mxu0
  %866 = vmatprep.mubr.f32.mxu0 0.0
  %v867 = vand.u32 %v101, 4294901760
  %v868 = vsub.f32 %v101, %v867
  %v869 = vand.u32 %v868, 4294901760
  %870 = vmatmul.mubr.f32.gmra.mrb[0].mxu0 %v869
  %v871 = vpop.f32.mrb[0].mxu0
  %v872 = vadd.f32 %v679, %v871
  %v873 = vpop.f32.mrb[0].mxu0
  %874 = vmatprep.mubr.f32.mxu0 0.0
  %v875 = vand.u32 %v104, 4294901760
  %v876 = vsub.f32 %v104, %v875
  %v877 = vand.u32 %v876, 4294901760
  %878 = vmatmul.mubr.f32.gmra.mrb[0].mxu0 %v877
  %v879 = vpop.f32.mrb[0].mxu0
  %v880 = vadd.f32 %v686, %v879
  %v881 = vpop.f32.mrb[0].mxu0
  %882 = vmatprep.mubr.f32.mxu0 0.0
  %v883 = vand.u32 %v107, 4294901760
  %v884 = vsub.f32 %v107, %v883
  %v885 = vand.u32 %v884, 4294901760
  %886 = vmatmul.mubr.f32.gmra.mrb[0].mxu0 %v885
  %v887 = vpop.f32.mrb[0].mxu0
  %v888 = vadd.f32 %v693, %v887
  %v889 = vpop.f32.mrb[0].mxu0
  %890 = vmatprep.mubr.f32.mxu0 0.0
  %v891 = vand.u32 %v110, 4294901760
  %v892 = vsub.f32 %v110, %v891
  %v893 = vand.u32 %v892, 4294901760
  %894 = vmatmul.mubr.f32.gmra.mrb[0].mxu0 %v893
  %v895 = vpop.f32.mrb[0].mxu0
  %v896 = vadd.f32 %v700, %v895
  %v897 = vpop.f32.mrb[0].mxu0
  %898 = vmatprep.mubr.f32.mxu0 0.0
  %v899 = vand.u32 %v113, 4294901760
  %v900 = vsub.f32 %v113, %v899
  %v901 = vand.u32 %v900, 4294901760
  %902 = vmatmul.mubr.f32.gmra.mrb[0].mxu0 %v901
  %v903 = vpop.f32.mrb[0].mxu0
  %v904 = vadd.f32 %v707, %v903
  %v905 = vpop.f32.mrb[0].mxu0
  %906 = vdwg.mxu0
  %907 = vmatprep.subr.mxu0 0.0
  %v908 = vand.u32 %v28, 4294901760
  %v909 = vsub.f32 %v28, %v908
  %v910 = vand.u32 %v909, 4294901760
  %911 = vmatpush1.msra.mxu0 %v910
  %912 = vmatprep.subr.mxu0 0.0
  %v913 = vand.u32 %v29, 4294901760
  %v914 = vsub.f32 %v29, %v913
  %v915 = vand.u32 %v914, 4294901760
  %916 = vmatpush1.msra.mxu0 %v915
  %917 = vmatprep.subr.mxu0 0.0
  %v918 = vand.u32 %v30, 4294901760
  %v919 = vsub.f32 %v30, %v918
  %v920 = vand.u32 %v919, 4294901760
  %921 = vmatpush1.msra.mxu0 %v920
  %922 = vmatprep.subr.mxu0 0.0
  %v923 = vand.u32 %v31, 4294901760
  %v924 = vsub.f32 %v31, %v923
  %v925 = vand.u32 %v924, 4294901760
  %926 = vmatpush1.msra.mxu0 %v925
  %927 = vmatprep.subr.mxu0 0.0
  %928 = vmatpush1.msra.mxu0 0.0
  %929 = vmatprep.subr.mxu0 0.0
  %930 = vmatpush1.msra.mxu0 0.0
  %931 = vmatprep.subr.mxu0 0.0
  %932 = vmatpush1.msra.mxu0 0.0
  %933 = vmatprep.subr.mxu0 0.0
  %934 = vmatpush1.msra.mxu0 0.0
  %935 = vmatprep.subr.mxu0 0.0
  %936 = vmatpush1.msra.mxu0 0.0
  %937 = vmatprep.subr.mxu0 0.0
  %938 = vmatpush1.msra.mxu0 0.0
  %939 = vmatprep.subr.mxu0 0.0
  %940 = vmatpush1.msra.mxu0 0.0
  %941 = vmatprep.subr.mxu0 0.0
  %942 = vmatpush1.msra.mxu0 0.0
  %943 = vmatprep.subr.mxu0 0.0
  %944 = vmatpush1.msra.mxu0 0.0
  %945 = vmatprep.subr.mxu0 0.0
  %946 = vmatpush1.msra.mxu0 0.0
  %947 = vmatprep.subr.mxu0 0.0
  %948 = vmatpush1.msra.mxu0 0.0
  %949 = vmatprep.subr.mxu0 0.0
  %950 = vmatpush1.msra.mxu0 0.0
  %951 = vmatprep.subr.mxu0 0.0
  %952 = vmatpush1.msra.mxu0 0.0
  %953 = vmatprep.subr.mxu0 0.0
  %954 = vmatpush1.msra.mxu0 0.0
  %955 = vmatprep.subr.mxu0 0.0
  %956 = vmatpush1.msra.mxu0 0.0
  %957 = vmatprep.subr.mxu0 0.0
  %958 = vmatpush1.msra.mxu0 0.0
  %959 = vmatprep.subr.mxu0 0.0
  %960 = vmatpush1.msra.mxu0 0.0
  %961 = vmatprep.subr.mxu0 0.0
  %962 = vmatpush1.msra.mxu0 0.0
  %963 = vmatprep.subr.mxu0 0.0
  %964 = vmatpush1.msra.mxu0 0.0
  %965 = vmatprep.subr.mxu0 0.0
  %966 = vmatpush1.msra.mxu0 0.0
  %967 = vmatprep.subr.mxu0 0.0
  %968 = vmatpush1.msra.mxu0 0.0
  %969 = vmatprep.subr.mxu0 0.0
  %970 = vmatpush1.msra.mxu0 0.0
  %971 = vmatprep.subr.mxu0 0.0
  %972 = vmatpush1.msra.mxu0 0.0
  %973 = vmatprep.subr.mxu0 0.0
  %974 = vmatpush1.msra.mxu0 0.0
  %975 = vmatprep.subr.mxu0 0.0
  %976 = vmatpush1.msra.mxu0 0.0
  %977 = vmatprep.subr.mxu0 0.0
  %978 = vmatpush1.msra.mxu0 0.0
  %979 = vmatprep.subr.mxu0 0.0
  %980 = vmatpush1.msra.mxu0 0.0
  %981 = vmatprep.subr.mxu0 0.0
  %982 = vmatpush1.msra.mxu0 0.0
  %983 = vmatprep.mubr.f32.mxu0 0.0
  %v984 = vand.u32 %v68, 4294901760
  %985 = vmatmul.mubr.f32.gmra.mrb[0].mxu0 %v984
  %v986 = vpop.f32.mrb[0].mxu0
  %v987 = vadd.f32 %v784, %v986
  %v988 = vpop.f32.mrb[0].mxu0
  %989 = vmatprep.mubr.f32.mxu0 0.0
  %v990 = vand.u32 %v71, 4294901760
  %991 = vmatmul.mubr.f32.gmra.mrb[0].mxu0 %v990
  %v992 = vpop.f32.mrb[0].mxu0
  %v993 = vadd.f32 %v792, %v992
  %v994 = vpop.f32.mrb[0].mxu0
  %995 = vmatprep.mubr.f32.mxu0 0.0
  %v996 = vand.u32 %v74, 4294901760
  %997 = vmatmul.mubr.f32.gmra.mrb[0].mxu0 %v996
  %v998 = vpop.f32.mrb[0].mxu0
  %v999 = vadd.f32 %v800, %v998
  %v1000 = vpop.f32.mrb[0].mxu0
  %1001 = vmatprep.mubr.f32.mxu0 0.0
  %v1002 = vand.u32 %v77, 4294901760
  %1003 = vmatmul.mubr.f32.gmra.mrb[0].mxu0 %v1002
  %v1004 = vpop.f32.mrb[0].mxu0
  %v1005 = vadd.f32 %v808, %v1004
  %v1006 = vpop.f32.mrb[0].mxu0
  %1007 = vmatprep.mubr.f32.mxu0 0.0
  %v1008 = vand.u32 %v80, 4294901760
  %1009 = vmatmul.mubr.f32.gmra.mrb[0].mxu0 %v1008
  %v1010 = vpop.f32.mrb[0].mxu0
  %v1011 = vadd.f32 %v816, %v1010
  %v1012 = vpop.f32.mrb[0].mxu0
  %1013 = vmatprep.mubr.f32.mxu0 0.0
  %v1014 = vand.u32 %v83, 4294901760
  %1015 = vmatmul.mubr.f32.gmra.mrb[0].mxu0 %v1014
  %v1016 = vpop.f32.mrb[0].mxu0
  %v1017 = vadd.f32 %v824, %v1016
  %v1018 = vpop.f32.mrb[0].mxu0
  %1019 = vmatprep.mubr.f32.mxu0 0.0
  %v1020 = vand.u32 %v86, 4294901760
  %1021 = vmatmul.mubr.f32.gmra.mrb[0].mxu0 %v1020
  %v1022 = vpop.f32.mrb[0].mxu0
  %v1023 = vadd.f32 %v832, %v1022
  %v1024 = vpop.f32.mrb[0].mxu0
  %1025 = vmatprep.mubr.f32.mxu0 0.0
  %v1026 = vand.u32 %v89, 4294901760
  %1027 = vmatmul.mubr.f32.gmra.mrb[0].mxu0 %v1026
  %v1028 = vpop.f32.mrb[0].mxu0
  %v1029 = vadd.f32 %v840, %v1028
  %v1030 = vpop.f32.mrb[0].mxu0
  %1031 = vmatprep.mubr.f32.mxu0 0.0
  %v1032 = vand.u32 %v92, 4294901760
  %1033 = vmatmul.mubr.f32.gmra.mrb[0].mxu0 %v1032
  %v1034 = vpop.f32.mrb[0].mxu0
  %v1035 = vadd.f32 %v848, %v1034
  %v1036 = vpop.f32.mrb[0].mxu0
  %1037 = vmatprep.mubr.f32.mxu0 0.0
  %v1038 = vand.u32 %v95, 4294901760
  %1039 = vmatmul.mubr.f32.gmra.mrb[0].mxu0 %v1038
  %v1040 = vpop.f32.mrb[0].mxu0
  %v1041 = vadd.f32 %v856, %v1040
  %v1042 = vpop.f32.mrb[0].mxu0
  %1043 = vmatprep.mubr.f32.mxu0 0.0
  %v1044 = vand.u32 %v98, 4294901760
  %1045 = vmatmul.mubr.f32.gmra.mrb[0].mxu0 %v1044
  %v1046 = vpop.f32.mrb[0].mxu0
  %v1047 = vadd.f32 %v864, %v1046
  %v1048 = vpop.f32.mrb[0].mxu0
  %1049 = vmatprep.mubr.f32.mxu0 0.0
  %v1050 = vand.u32 %v101, 4294901760
  %1051 = vmatmul.mubr.f32.gmra.mrb[0].mxu0 %v1050
  %v1052 = vpop.f32.mrb[0].mxu0
  %v1053 = vadd.f32 %v872, %v1052
  %v1054 = vpop.f32.mrb[0].mxu0
  %1055 = vmatprep.mubr.f32.mxu0 0.0
  %v1056 = vand.u32 %v104, 4294901760
  %1057 = vmatmul.mubr.f32.gmra.mrb[0].mxu0 %v1056
  %v1058 = vpop.f32.mrb[0].mxu0
  %v1059 = vadd.f32 %v880, %v1058
  %v1060 = vpop.f32.mrb[0].mxu0
  %1061 = vmatprep.mubr.f32.mxu0 0.0
  %v1062 = vand.u32 %v107, 4294901760
  %1063 = vmatmul.mubr.f32.gmra.mrb[0].mxu0 %v1062
  %v1064 = vpop.f32.mrb[0].mxu0
  %v1065 = vadd.f32 %v888, %v1064
  %v1066 = vpop.f32.mrb[0].mxu0
  %1067 = vmatprep.mubr.f32.mxu0 0.0
  %v1068 = vand.u32 %v110, 4294901760
  %1069 = vmatmul.mubr.f32.gmra.mrb[0].mxu0 %v1068
  %v1070 = vpop.f32.mrb[0].mxu0
  %v1071 = vadd.f32 %v896, %v1070
  %v1072 = vpop.f32.mrb[0].mxu0
  %1073 = vmatprep.mubr.f32.mxu0 0.0
  %v1074 = vand.u32 %v113, 4294901760
  %1075 = vmatmul.mubr.f32.gmra.mrb[0].mxu0 %v1074
  %v1076 = vpop.f32.mrb[0].mxu0
  %v1077 = vadd.f32 %v904, %v1076
  %v1078 = vpop.f32.mrb[0].mxu0
  %1079 = vdwg.mxu0
  %1080 = vmatprep.subr.mxu0 0.0
  %v1081 = vand.u32 %v28, 4294901760
  %1082 = vmatpush1.msra.mxu0 %v1081
  %1083 = vmatprep.subr.mxu0 0.0
  %v1084 = vand.u32 %v29, 4294901760
  %1085 = vmatpush1.msra.mxu0 %v1084
  %1086 = vmatprep.subr.mxu0 0.0
  %v1087 = vand.u32 %v30, 4294901760
  %1088 = vmatpush1.msra.mxu0 %v1087
  %1089 = vmatprep.subr.mxu0 0.0
  %v1090 = vand.u32 %v31, 4294901760
  %1091 = vmatpush1.msra.mxu0 %v1090
  %1092 = vmatprep.subr.mxu0 0.0
  %1093 = vmatpush1.msra.mxu0 0.0
  %1094 = vmatprep.subr.mxu0 0.0
  %1095 = vmatpush1.msra.mxu0 0.0
  %1096 = vmatprep.subr.mxu0 0.0
  %1097 = vmatpush1.msra.mxu0 0.0
  %1098 = vmatprep.subr.mxu0 0.0
  %1099 = vmatpush1.msra.mxu0 0.0
  %1100 = vmatprep.subr.mxu0 0.0
  %1101 = vmatpush1.msra.mxu0 0.0
  %1102 = vmatprep.subr.mxu0 0.0
  %1103 = vmatpush1.msra.mxu0 0.0
  %1104 = vmatprep.subr.mxu0 0.0
  %1105 = vmatpush1.msra.mxu0 0.0
  %1106 = vmatprep.subr.mxu0 0.0
  %1107 = vmatpush1.msra.mxu0 0.0
  %1108 = vmatprep.subr.mxu0 0.0
  %1109 = vmatpush1.msra.mxu0 0.0
  %1110 = vmatprep.subr.mxu0 0.0
  %1111 = vmatpush1.msra.mxu0 0.0
  %1112 = vmatprep.subr.mxu0 0.0
  %1113 = vmatpush1.msra.mxu0 0.0
  %1114 = vmatprep.subr.mxu0 0.0
  %1115 = vmatpush1.msra.mxu0 0.0
  %1116 = vmatprep.subr.mxu0 0.0
  %1117 = vmatpush1.msra.mxu0 0.0
  %1118 = vmatprep.subr.mxu0 0.0
  %1119 = vmatpush1.msra.mxu0 0.0
  %1120 = vmatprep.subr.mxu0 0.0
  %1121 = vmatpush1.msra.mxu0 0.0
  %1122 = vmatprep.subr.mxu0 0.0
  %1123 = vmatpush1.msra.mxu0 0.0
  %1124 = vmatprep.subr.mxu0 0.0
  %1125 = vmatpush1.msra.mxu0 0.0
  %1126 = vmatprep.subr.mxu0 0.0
  %1127 = vmatpush1.msra.mxu0 0.0
  %1128 = vmatprep.subr.mxu0 0.0
  %1129 = vmatpush1.msra.mxu0 0.0
  %1130 = vmatprep.subr.mxu0 0.0
  %1131 = vmatpush1.msra.mxu0 0.0
  %1132 = vmatprep.subr.mxu0 0.0
  %1133 = vmatpush1.msra.mxu0 0.0
  %1134 = vmatprep.subr.mxu0 0.0
  %1135 = vmatpush1.msra.mxu0 0.0
  %1136 = vmatprep.subr.mxu0 0.0
  %1137 = vmatpush1.msra.mxu0 0.0
  %1138 = vmatprep.subr.mxu0 0.0
  %1139 = vmatpush1.msra.mxu0 0.0
  %1140 = vmatprep.subr.mxu0 0.0
  %1141 = vmatpush1.msra.mxu0 0.0
  %1142 = vmatprep.subr.mxu0 0.0
  %1143 = vmatpush1.msra.mxu0 0.0
  %1144 = vmatprep.subr.mxu0 0.0
  %1145 = vmatpush1.msra.mxu0 0.0
  %1146 = vmatprep.subr.mxu0 0.0
  %1147 = vmatpush1.msra.mxu0 0.0
  %1148 = vmatprep.mubr.f32.mxu0 0.0
  %v1149 = vand.u32 %v68, 4294901760
  %1150 = vmatmul.mubr.f32.gmra.mrb[0].mxu0 %v1149
  %v1151 = vpop.f32.mrb[0].mxu0
  %v1152 = vadd.f32 %v987, %v1151
  %v1153 = vpop.f32.mrb[0].mxu0
  %1154 = vmatprep.mubr.f32.mxu0 0.0
  %v1155 = vand.u32 %v71, 4294901760
  %1156 = vmatmul.mubr.f32.gmra.mrb[0].mxu0 %v1155
  %v1157 = vpop.f32.mrb[0].mxu0
  %v1158 = vadd.f32 %v993, %v1157
  %v1159 = vpop.f32.mrb[0].mxu0
  %1160 = vmatprep.mubr.f32.mxu0 0.0
  %v1161 = vand.u32 %v74, 4294901760
  %1162 = vmatmul.mubr.f32.gmra.mrb[0].mxu0 %v1161
  %v1163 = vpop.f32.mrb[0].mxu0
  %v1164 = vadd.f32 %v999, %v1163
  %v1165 = vpop.f32.mrb[0].mxu0
  %1166 = vmatprep.mubr.f32.mxu0 0.0
  %v1167 = vand.u32 %v77, 4294901760
  %1168 = vmatmul.mubr.f32.gmra.mrb[0].mxu0 %v1167
  %v1169 = vpop.f32.mrb[0].mxu0
  %v1170 = vadd.f32 %v1005, %v1169
  %v1171 = vpop.f32.mrb[0].mxu0
  %1172 = vmatprep.mubr.f32.mxu0 0.0
  %v1173 = vand.u32 %v80, 4294901760
  %1174 = vmatmul.mubr.f32.gmra.mrb[0].mxu0 %v1173
  %v1175 = vpop.f32.mrb[0].mxu0
  %v1176 = vadd.f32 %v1011, %v1175
  %v1177 = vpop.f32.mrb[0].mxu0
  %1178 = vmatprep.mubr.f32.mxu0 0.0
  %v1179 = vand.u32 %v83, 4294901760
  %1180 = vmatmul.mubr.f32.gmra.mrb[0].mxu0 %v1179
  %v1181 = vpop.f32.mrb[0].mxu0
  %v1182 = vadd.f32 %v1017, %v1181
  %v1183 = vpop.f32.mrb[0].mxu0
  %1184 = vmatprep.mubr.f32.mxu0 0.0
  %v1185 = vand.u32 %v86, 4294901760
  %1186 = vmatmul.mubr.f32.gmra.mrb[0].mxu0 %v1185
  %v1187 = vpop.f32.mrb[0].mxu0
  %v1188 = vadd.f32 %v1023, %v1187
  %v1189 = vpop.f32.mrb[0].mxu0
  %1190 = vmatprep.mubr.f32.mxu0 0.0
  %v1191 = vand.u32 %v89, 4294901760
  %1192 = vmatmul.mubr.f32.gmra.mrb[0].mxu0 %v1191
  %v1193 = vpop.f32.mrb[0].mxu0
  %v1194 = vadd.f32 %v1029, %v1193
  %v1195 = vpop.f32.mrb[0].mxu0
  %1196 = vmatprep.mubr.f32.mxu0 0.0
  %v1197 = vand.u32 %v92, 4294901760
  %1198 = vmatmul.mubr.f32.gmra.mrb[0].mxu0 %v1197
  %v1199 = vpop.f32.mrb[0].mxu0
  %v1200 = vadd.f32 %v1035, %v1199
  %v1201 = vpop.f32.mrb[0].mxu0
  %1202 = vmatprep.mubr.f32.mxu0 0.0
  %v1203 = vand.u32 %v95, 4294901760
  %1204 = vmatmul.mubr.f32.gmra.mrb[0].mxu0 %v1203
  %v1205 = vpop.f32.mrb[0].mxu0
  %v1206 = vadd.f32 %v1041, %v1205
  %v1207 = vpop.f32.mrb[0].mxu0
  %1208 = vmatprep.mubr.f32.mxu0 0.0
  %v1209 = vand.u32 %v98, 4294901760
  %1210 = vmatmul.mubr.f32.gmra.mrb[0].mxu0 %v1209
  %v1211 = vpop.f32.mrb[0].mxu0
  %v1212 = vadd.f32 %v1047, %v1211
  %v1213 = vpop.f32.mrb[0].mxu0
  %1214 = vmatprep.mubr.f32.mxu0 0.0
  %v1215 = vand.u32 %v101, 4294901760
  %1216 = vmatmul.mubr.f32.gmra.mrb[0].mxu0 %v1215
  %v1217 = vpop.f32.mrb[0].mxu0
  %v1218 = vadd.f32 %v1053, %v1217
  %v1219 = vpop.f32.mrb[0].mxu0
  %1220 = vmatprep.mubr.f32.mxu0 0.0
  %v1221 = vand.u32 %v104, 4294901760
  %1222 = vmatmul.mubr.f32.gmra.mrb[0].mxu0 %v1221
  %v1223 = vpop.f32.mrb[0].mxu0
  %v1224 = vadd.f32 %v1059, %v1223
  %v1225 = vpop.f32.mrb[0].mxu0
  %1226 = vmatprep.mubr.f32.mxu0 0.0
  %v1227 = vand.u32 %v107, 4294901760
  %1228 = vmatmul.mubr.f32.gmra.mrb[0].mxu0 %v1227
  %v1229 = vpop.f32.mrb[0].mxu0
  %v1230 = vadd.f32 %v1065, %v1229
  %v1231 = vpop.f32.mrb[0].mxu0
  %1232 = vmatprep.mubr.f32.mxu0 0.0
  %v1233 = vand.u32 %v110, 4294901760
  %1234 = vmatmul.mubr.f32.gmra.mrb[0].mxu0 %v1233
  %v1235 = vpop.f32.mrb[0].mxu0
  %v1236 = vadd.f32 %v1071, %v1235
  %v1237 = vpop.f32.mrb[0].mxu0
  %1238 = vmatprep.mubr.f32.mxu0 0.0
  %v1239 = vand.u32 %v113, 4294901760
  %1240 = vmatmul.mubr.f32.gmra.mrb[0].mxu0 %v1239
  %v1241 = vpop.f32.mrb[0].mxu0
  %v1242 = vadd.f32 %v1077, %v1241
  %v1243 = vpop.f32.mrb[0].mxu0
  %1244 = vdwg.mxu0
  %v1245 = vmax.f32 %v1152, 0.0
  %v1246 = vmax.f32 %v1158, 0.0
  %v1247 = vmax.f32 %v1164, 0.0
  %v1248 = vmax.f32 %v1170, 0.0
  %v1249 = vmax.f32 %v1176, 0.0
  %v1250 = vmax.f32 %v1182, 0.0
  %v1251 = vmax.f32 %v1188, 0.0
  %v1252 = vmax.f32 %v1194, 0.0
  %v1253 = vmax.f32 %v1200, 0.0
  %v1254 = vmax.f32 %v1206, 0.0
  %v1255 = vmax.f32 %v1212, 0.0
  %v1256 = vmax.f32 %v1218, 0.0
  %v1257 = vmax.f32 %v1224, 0.0
  %v1258 = vmax.f32 %v1230, 0.0
  %v1259 = vmax.f32 %v1236, 0.0
  %v1260 = vmax.f32 %v1242, 0.0
  %v1262 = vlaneseq
  %v1263 = vshrl.u32 %v1262, 7
  %v1264 = vsub.s32 0, %v1263
  %v1265 = vrot.slane %v41, %v1264
  %vm1267 = vcmask 523264
  %v1269 = vsel %vm1267, %v1245, 0
  %v1272 = vsel %vm1267, %v1246, 0
  %v1275 = vsel %vm1267, %v1247, 0
  %v1278 = vsel %vm1267, %v1248, 0
  %v1281 = vsel %vm1267, %v1249, 0
  %v1284 = vsel %vm1267, %v1250, 0
  %v1287 = vsel %vm1267, %v1251, 0
  %v1290 = vsel %vm1267, %v1252, 0
  %v1293 = vsel %vm1267, %v1253, 0
  %v1296 = vsel %vm1267, %v1254, 0
  %v1299 = vsel %vm1267, %v1255, 0
  %v1302 = vsel %vm1267, %v1256, 0
  %v1305 = vsel %vm1267, %v1257, 0
  %v1308 = vsel %vm1267, %v1258, 0
  %v1311 = vsel %vm1267, %v1259, 0
  %v1314 = vsel %vm1267, %v1260, 0
  %1316 = vmatprep.subr.mxu0 0.0
  %v1317 = vand.u32 %v32, 4294901760
  %1318 = vmatpush1.msra.mxu0 %v1317
  %1319 = vmatprep.subr.mxu0 0.0
  %v1320 = vand.u32 %v33, 4294901760
  %1321 = vmatpush1.msra.mxu0 %v1320
  %1322 = vmatprep.subr.mxu0 0.0
  %v1323 = vand.u32 %v34, 4294901760
  %1324 = vmatpush1.msra.mxu0 %v1323
  %1325 = vmatprep.subr.mxu0 0.0
  %v1326 = vand.u32 %v35, 4294901760
  %1327 = vmatpush1.msra.mxu0 %v1326
  %1328 = vmatprep.subr.mxu0 0.0
  %v1329 = vand.u32 %v36, 4294901760
  %1330 = vmatpush1.msra.mxu0 %v1329
  %1331 = vmatprep.subr.mxu0 0.0
  %v1332 = vand.u32 %v37, 4294901760
  %1333 = vmatpush1.msra.mxu0 %v1332
  %1334 = vmatprep.subr.mxu0 0.0
  %v1335 = vand.u32 %v38, 4294901760
  %1336 = vmatpush1.msra.mxu0 %v1335
  %1337 = vmatprep.subr.mxu0 0.0
  %v1338 = vand.u32 %v39, 4294901760
  %1339 = vmatpush1.msra.mxu0 %v1338
  %1340 = vmatprep.subr.mxu0 0.0
  %1341 = vmatpush1.msra.mxu0 0.0
  %1342 = vmatprep.subr.mxu0 0.0
  %1343 = vmatpush1.msra.mxu0 0.0
  %1344 = vmatprep.subr.mxu0 0.0
  %1345 = vmatpush1.msra.mxu0 0.0
  %1346 = vmatprep.subr.mxu0 0.0
  %1347 = vmatpush1.msra.mxu0 0.0
  %1348 = vmatprep.subr.mxu0 0.0
  %1349 = vmatpush1.msra.mxu0 0.0
  %1350 = vmatprep.subr.mxu0 0.0
  %1351 = vmatpush1.msra.mxu0 0.0
  %1352 = vmatprep.subr.mxu0 0.0
  %1353 = vmatpush1.msra.mxu0 0.0
  %1354 = vmatprep.subr.mxu0 0.0
  %1355 = vmatpush1.msra.mxu0 0.0
  %1356 = vmatprep.subr.mxu0 0.0
  %1357 = vmatpush1.msra.mxu0 0.0
  %1358 = vmatprep.subr.mxu0 0.0
  %1359 = vmatpush1.msra.mxu0 0.0
  %1360 = vmatprep.subr.mxu0 0.0
  %1361 = vmatpush1.msra.mxu0 0.0
  %1362 = vmatprep.subr.mxu0 0.0
  %1363 = vmatpush1.msra.mxu0 0.0
  %1364 = vmatprep.subr.mxu0 0.0
  %1365 = vmatpush1.msra.mxu0 0.0
  %1366 = vmatprep.subr.mxu0 0.0
  %1367 = vmatpush1.msra.mxu0 0.0
  %1368 = vmatprep.subr.mxu0 0.0
  %1369 = vmatpush1.msra.mxu0 0.0
  %1370 = vmatprep.subr.mxu0 0.0
  %1371 = vmatpush1.msra.mxu0 0.0
  %1372 = vmatprep.subr.mxu0 0.0
  %1373 = vmatpush1.msra.mxu0 0.0
  %1374 = vmatprep.subr.mxu0 0.0
  %1375 = vmatpush1.msra.mxu0 0.0
  %1376 = vmatprep.subr.mxu0 0.0
  %1377 = vmatpush1.msra.mxu0 0.0
  %1378 = vmatprep.subr.mxu0 0.0
  %1379 = vmatpush1.msra.mxu0 0.0
  %1380 = vmatprep.subr.mxu0 0.0
  %1381 = vmatpush1.msra.mxu0 0.0
  %1382 = vmatprep.subr.mxu0 0.0
  %1383 = vmatpush1.msra.mxu0 0.0
  %1384 = vmatprep.subr.mxu0 0.0
  %1385 = vmatpush1.msra.mxu0 0.0
  %1386 = vmatprep.subr.mxu0 0.0
  %1387 = vmatpush1.msra.mxu0 0.0
  %1388 = vmatprep.mubr.f32.mxu0 0.0
  %v1389 = vand.u32 %v1269, 4294901760
  %v1390 = vsub.f32 %v1269, %v1389
  %v1391 = vand.u32 %v1390, 4294901760
  %v1392 = vsub.f32 %v1390, %v1391
  %v1393 = vand.u32 %v1392, 4294901760
  %1394 = vmatmul.mubr.f32.gmra.mrb[0].mxu0 %v1393
  %v1395 = vpop.f32.mrb[0].mxu0
  %v1396 = vadd.f32 %v1265, %v1395
  %v1397 = vpop.f32.mrb[0].mxu0
  %1398 = vmatprep.mubr.f32.mxu0 0.0
  %v1399 = vand.u32 %v1272, 4294901760
  %v1400 = vsub.f32 %v1272, %v1399
  %v1401 = vand.u32 %v1400, 4294901760
  %v1402 = vsub.f32 %v1400, %v1401
  %v1403 = vand.u32 %v1402, 4294901760
  %1404 = vmatmul.mubr.f32.gmra.mrb[0].mxu0 %v1403
  %v1405 = vpop.f32.mrb[0].mxu0
  %v1406 = vadd.f32 %v1265, %v1405
  %v1407 = vpop.f32.mrb[0].mxu0
  %1408 = vmatprep.mubr.f32.mxu0 0.0
  %v1409 = vand.u32 %v1275, 4294901760
  %v1410 = vsub.f32 %v1275, %v1409
  %v1411 = vand.u32 %v1410, 4294901760
  %v1412 = vsub.f32 %v1410, %v1411
  %v1413 = vand.u32 %v1412, 4294901760
  %1414 = vmatmul.mubr.f32.gmra.mrb[0].mxu0 %v1413
  %v1415 = vpop.f32.mrb[0].mxu0
  %v1416 = vadd.f32 %v1265, %v1415
  %v1417 = vpop.f32.mrb[0].mxu0
  %1418 = vmatprep.mubr.f32.mxu0 0.0
  %v1419 = vand.u32 %v1278, 4294901760
  %v1420 = vsub.f32 %v1278, %v1419
  %v1421 = vand.u32 %v1420, 4294901760
  %v1422 = vsub.f32 %v1420, %v1421
  %v1423 = vand.u32 %v1422, 4294901760
  %1424 = vmatmul.mubr.f32.gmra.mrb[0].mxu0 %v1423
  %v1425 = vpop.f32.mrb[0].mxu0
  %v1426 = vadd.f32 %v1265, %v1425
  %v1427 = vpop.f32.mrb[0].mxu0
  %1428 = vmatprep.mubr.f32.mxu0 0.0
  %v1429 = vand.u32 %v1281, 4294901760
  %v1430 = vsub.f32 %v1281, %v1429
  %v1431 = vand.u32 %v1430, 4294901760
  %v1432 = vsub.f32 %v1430, %v1431
  %v1433 = vand.u32 %v1432, 4294901760
  %1434 = vmatmul.mubr.f32.gmra.mrb[0].mxu0 %v1433
  %v1435 = vpop.f32.mrb[0].mxu0
  %v1436 = vadd.f32 %v1265, %v1435
  %v1437 = vpop.f32.mrb[0].mxu0
  %1438 = vmatprep.mubr.f32.mxu0 0.0
  %v1439 = vand.u32 %v1284, 4294901760
  %v1440 = vsub.f32 %v1284, %v1439
  %v1441 = vand.u32 %v1440, 4294901760
  %v1442 = vsub.f32 %v1440, %v1441
  %v1443 = vand.u32 %v1442, 4294901760
  %1444 = vmatmul.mubr.f32.gmra.mrb[0].mxu0 %v1443
  %v1445 = vpop.f32.mrb[0].mxu0
  %v1446 = vadd.f32 %v1265, %v1445
  %v1447 = vpop.f32.mrb[0].mxu0
  %1448 = vmatprep.mubr.f32.mxu0 0.0
  %v1449 = vand.u32 %v1287, 4294901760
  %v1450 = vsub.f32 %v1287, %v1449
  %v1451 = vand.u32 %v1450, 4294901760
  %v1452 = vsub.f32 %v1450, %v1451
  %v1453 = vand.u32 %v1452, 4294901760
  %1454 = vmatmul.mubr.f32.gmra.mrb[0].mxu0 %v1453
  %v1455 = vpop.f32.mrb[0].mxu0
  %v1456 = vadd.f32 %v1265, %v1455
  %v1457 = vpop.f32.mrb[0].mxu0
  %1458 = vmatprep.mubr.f32.mxu0 0.0
  %v1459 = vand.u32 %v1290, 4294901760
  %v1460 = vsub.f32 %v1290, %v1459
  %v1461 = vand.u32 %v1460, 4294901760
  %v1462 = vsub.f32 %v1460, %v1461
  %v1463 = vand.u32 %v1462, 4294901760
  %1464 = vmatmul.mubr.f32.gmra.mrb[0].mxu0 %v1463
  %v1465 = vpop.f32.mrb[0].mxu0
  %v1466 = vadd.f32 %v1265, %v1465
  %v1467 = vpop.f32.mrb[0].mxu0
  %1468 = vmatprep.mubr.f32.mxu0 0.0
  %v1469 = vand.u32 %v1293, 4294901760
  %v1470 = vsub.f32 %v1293, %v1469
  %v1471 = vand.u32 %v1470, 4294901760
  %v1472 = vsub.f32 %v1470, %v1471
  %v1473 = vand.u32 %v1472, 4294901760
  %1474 = vmatmul.mubr.f32.gmra.mrb[0].mxu0 %v1473
  %v1475 = vpop.f32.mrb[0].mxu0
  %v1476 = vadd.f32 %v1265, %v1475
  %v1477 = vpop.f32.mrb[0].mxu0
  %1478 = vmatprep.mubr.f32.mxu0 0.0
  %v1479 = vand.u32 %v1296, 4294901760
  %v1480 = vsub.f32 %v1296, %v1479
  %v1481 = vand.u32 %v1480, 4294901760
  %v1482 = vsub.f32 %v1480, %v1481
  %v1483 = vand.u32 %v1482, 4294901760
  %1484 = vmatmul.mubr.f32.gmra.mrb[0].mxu0 %v1483
  %v1485 = vpop.f32.mrb[0].mxu0
  %v1486 = vadd.f32 %v1265, %v1485
  %v1487 = vpop.f32.mrb[0].mxu0
  %1488 = vmatprep.mubr.f32.mxu0 0.0
  %v1489 = vand.u32 %v1299, 4294901760
  %v1490 = vsub.f32 %v1299, %v1489
  %v1491 = vand.u32 %v1490, 4294901760
  %v1492 = vsub.f32 %v1490, %v1491
  %v1493 = vand.u32 %v1492, 4294901760
  %1494 = vmatmul.mubr.f32.gmra.mrb[0].mxu0 %v1493
  %v1495 = vpop.f32.mrb[0].mxu0
  %v1496 = vadd.f32 %v1265, %v1495
  %v1497 = vpop.f32.mrb[0].mxu0
  %1498 = vmatprep.mubr.f32.mxu0 0.0
  %v1499 = vand.u32 %v1302, 4294901760
  %v1500 = vsub.f32 %v1302, %v1499
  %v1501 = vand.u32 %v1500, 4294901760
  %v1502 = vsub.f32 %v1500, %v1501
  %v1503 = vand.u32 %v1502, 4294901760
  %1504 = vmatmul.mubr.f32.gmra.mrb[0].mxu0 %v1503
  %v1505 = vpop.f32.mrb[0].mxu0
  %v1506 = vadd.f32 %v1265, %v1505
  %v1507 = vpop.f32.mrb[0].mxu0
  %1508 = vmatprep.mubr.f32.mxu0 0.0
  %v1509 = vand.u32 %v1305, 4294901760
  %v1510 = vsub.f32 %v1305, %v1509
  %v1511 = vand.u32 %v1510, 4294901760
  %v1512 = vsub.f32 %v1510, %v1511
  %v1513 = vand.u32 %v1512, 4294901760
  %1514 = vmatmul.mubr.f32.gmra.mrb[0].mxu0 %v1513
  %v1515 = vpop.f32.mrb[0].mxu0
  %v1516 = vadd.f32 %v1265, %v1515
  %v1517 = vpop.f32.mrb[0].mxu0
  %1518 = vmatprep.mubr.f32.mxu0 0.0
  %v1519 = vand.u32 %v1308, 4294901760
  %v1520 = vsub.f32 %v1308, %v1519
  %v1521 = vand.u32 %v1520, 4294901760
  %v1522 = vsub.f32 %v1520, %v1521
  %v1523 = vand.u32 %v1522, 4294901760
  %1524 = vmatmul.mubr.f32.gmra.mrb[0].mxu0 %v1523
  %v1525 = vpop.f32.mrb[0].mxu0
  %v1526 = vadd.f32 %v1265, %v1525
  %v1527 = vpop.f32.mrb[0].mxu0
  %1528 = vmatprep.mubr.f32.mxu0 0.0
  %v1529 = vand.u32 %v1311, 4294901760
  %v1530 = vsub.f32 %v1311, %v1529
  %v1531 = vand.u32 %v1530, 4294901760
  %v1532 = vsub.f32 %v1530, %v1531
  %v1533 = vand.u32 %v1532, 4294901760
  %1534 = vmatmul.mubr.f32.gmra.mrb[0].mxu0 %v1533
  %v1535 = vpop.f32.mrb[0].mxu0
  %v1536 = vadd.f32 %v1265, %v1535
  %v1537 = vpop.f32.mrb[0].mxu0
  %1538 = vmatprep.mubr.f32.mxu0 0.0
  %v1539 = vand.u32 %v1314, 4294901760
  %v1540 = vsub.f32 %v1314, %v1539
  %v1541 = vand.u32 %v1540, 4294901760
  %v1542 = vsub.f32 %v1540, %v1541
  %v1543 = vand.u32 %v1542, 4294901760
  %1544 = vmatmul.mubr.f32.gmra.mrb[0].mxu0 %v1543
  %v1545 = vpop.f32.mrb[0].mxu0
  %v1546 = vadd.f32 %v1265, %v1545
  %v1547 = vpop.f32.mrb[0].mxu0
  %1548 = vdwg.mxu0
  %1549 = vmatprep.subr.mxu0 0.0
  %v1550 = vand.u32 %v32, 4294901760
  %v1551 = vsub.f32 %v32, %v1550
  %v1552 = vand.u32 %v1551, 4294901760
  %v1553 = vsub.f32 %v1551, %v1552
  %v1554 = vand.u32 %v1553, 4294901760
  %1555 = vmatpush1.msra.mxu0 %v1554
  %1556 = vmatprep.subr.mxu0 0.0
  %v1557 = vand.u32 %v33, 4294901760
  %v1558 = vsub.f32 %v33, %v1557
  %v1559 = vand.u32 %v1558, 4294901760
  %v1560 = vsub.f32 %v1558, %v1559
  %v1561 = vand.u32 %v1560, 4294901760
  %1562 = vmatpush1.msra.mxu0 %v1561
  %1563 = vmatprep.subr.mxu0 0.0
  %v1564 = vand.u32 %v34, 4294901760
  %v1565 = vsub.f32 %v34, %v1564
  %v1566 = vand.u32 %v1565, 4294901760
  %v1567 = vsub.f32 %v1565, %v1566
  %v1568 = vand.u32 %v1567, 4294901760
  %1569 = vmatpush1.msra.mxu0 %v1568
  %1570 = vmatprep.subr.mxu0 0.0
  %v1571 = vand.u32 %v35, 4294901760
  %v1572 = vsub.f32 %v35, %v1571
  %v1573 = vand.u32 %v1572, 4294901760
  %v1574 = vsub.f32 %v1572, %v1573
  %v1575 = vand.u32 %v1574, 4294901760
  %1576 = vmatpush1.msra.mxu0 %v1575
  %1577 = vmatprep.subr.mxu0 0.0
  %v1578 = vand.u32 %v36, 4294901760
  %v1579 = vsub.f32 %v36, %v1578
  %v1580 = vand.u32 %v1579, 4294901760
  %v1581 = vsub.f32 %v1579, %v1580
  %v1582 = vand.u32 %v1581, 4294901760
  %1583 = vmatpush1.msra.mxu0 %v1582
  %1584 = vmatprep.subr.mxu0 0.0
  %v1585 = vand.u32 %v37, 4294901760
  %v1586 = vsub.f32 %v37, %v1585
  %v1587 = vand.u32 %v1586, 4294901760
  %v1588 = vsub.f32 %v1586, %v1587
  %v1589 = vand.u32 %v1588, 4294901760
  %1590 = vmatpush1.msra.mxu0 %v1589
  %1591 = vmatprep.subr.mxu0 0.0
  %v1592 = vand.u32 %v38, 4294901760
  %v1593 = vsub.f32 %v38, %v1592
  %v1594 = vand.u32 %v1593, 4294901760
  %v1595 = vsub.f32 %v1593, %v1594
  %v1596 = vand.u32 %v1595, 4294901760
  %1597 = vmatpush1.msra.mxu0 %v1596
  %1598 = vmatprep.subr.mxu0 0.0
  %v1599 = vand.u32 %v39, 4294901760
  %v1600 = vsub.f32 %v39, %v1599
  %v1601 = vand.u32 %v1600, 4294901760
  %v1602 = vsub.f32 %v1600, %v1601
  %v1603 = vand.u32 %v1602, 4294901760
  %1604 = vmatpush1.msra.mxu0 %v1603
  %1605 = vmatprep.subr.mxu0 0.0
  %1606 = vmatpush1.msra.mxu0 0.0
  %1607 = vmatprep.subr.mxu0 0.0
  %1608 = vmatpush1.msra.mxu0 0.0
  %1609 = vmatprep.subr.mxu0 0.0
  %1610 = vmatpush1.msra.mxu0 0.0
  %1611 = vmatprep.subr.mxu0 0.0
  %1612 = vmatpush1.msra.mxu0 0.0
  %1613 = vmatprep.subr.mxu0 0.0
  %1614 = vmatpush1.msra.mxu0 0.0
  %1615 = vmatprep.subr.mxu0 0.0
  %1616 = vmatpush1.msra.mxu0 0.0
  %1617 = vmatprep.subr.mxu0 0.0
  %1618 = vmatpush1.msra.mxu0 0.0
  %1619 = vmatprep.subr.mxu0 0.0
  %1620 = vmatpush1.msra.mxu0 0.0
  %1621 = vmatprep.subr.mxu0 0.0
  %1622 = vmatpush1.msra.mxu0 0.0
  %1623 = vmatprep.subr.mxu0 0.0
  %1624 = vmatpush1.msra.mxu0 0.0
  %1625 = vmatprep.subr.mxu0 0.0
  %1626 = vmatpush1.msra.mxu0 0.0
  %1627 = vmatprep.subr.mxu0 0.0
  %1628 = vmatpush1.msra.mxu0 0.0
  %1629 = vmatprep.subr.mxu0 0.0
  %1630 = vmatpush1.msra.mxu0 0.0
  %1631 = vmatprep.subr.mxu0 0.0
  %1632 = vmatpush1.msra.mxu0 0.0
  %1633 = vmatprep.subr.mxu0 0.0
  %1634 = vmatpush1.msra.mxu0 0.0
  %1635 = vmatprep.subr.mxu0 0.0
  %1636 = vmatpush1.msra.mxu0 0.0
  %1637 = vmatprep.subr.mxu0 0.0
  %1638 = vmatpush1.msra.mxu0 0.0
  %1639 = vmatprep.subr.mxu0 0.0
  %1640 = vmatpush1.msra.mxu0 0.0
  %1641 = vmatprep.subr.mxu0 0.0
  %1642 = vmatpush1.msra.mxu0 0.0
  %1643 = vmatprep.subr.mxu0 0.0
  %1644 = vmatpush1.msra.mxu0 0.0
  %1645 = vmatprep.subr.mxu0 0.0
  %1646 = vmatpush1.msra.mxu0 0.0
  %1647 = vmatprep.subr.mxu0 0.0
  %1648 = vmatpush1.msra.mxu0 0.0
  %1649 = vmatprep.subr.mxu0 0.0
  %1650 = vmatpush1.msra.mxu0 0.0
  %1651 = vmatprep.subr.mxu0 0.0
  %1652 = vmatpush1.msra.mxu0 0.0
  %1653 = vmatprep.mubr.f32.mxu0 0.0
  %v1654 = vand.u32 %v1269, 4294901760
  %1655 = vmatmul.mubr.f32.gmra.mrb[0].mxu0 %v1654
  %v1656 = vpop.f32.mrb[0].mxu0
  %v1657 = vadd.f32 %v1396, %v1656
  %v1658 = vpop.f32.mrb[0].mxu0
  %1659 = vmatprep.mubr.f32.mxu0 0.0
  %v1660 = vand.u32 %v1272, 4294901760
  %1661 = vmatmul.mubr.f32.gmra.mrb[0].mxu0 %v1660
  %v1662 = vpop.f32.mrb[0].mxu0
  %v1663 = vadd.f32 %v1406, %v1662
  %v1664 = vpop.f32.mrb[0].mxu0
  %1665 = vmatprep.mubr.f32.mxu0 0.0
  %v1666 = vand.u32 %v1275, 4294901760
  %1667 = vmatmul.mubr.f32.gmra.mrb[0].mxu0 %v1666
  %v1668 = vpop.f32.mrb[0].mxu0
  %v1669 = vadd.f32 %v1416, %v1668
  %v1670 = vpop.f32.mrb[0].mxu0
  %1671 = vmatprep.mubr.f32.mxu0 0.0
  %v1672 = vand.u32 %v1278, 4294901760
  %1673 = vmatmul.mubr.f32.gmra.mrb[0].mxu0 %v1672
  %v1674 = vpop.f32.mrb[0].mxu0
  %v1675 = vadd.f32 %v1426, %v1674
  %v1676 = vpop.f32.mrb[0].mxu0
  %1677 = vmatprep.mubr.f32.mxu0 0.0
  %v1678 = vand.u32 %v1281, 4294901760
  %1679 = vmatmul.mubr.f32.gmra.mrb[0].mxu0 %v1678
  %v1680 = vpop.f32.mrb[0].mxu0
  %v1681 = vadd.f32 %v1436, %v1680
  %v1682 = vpop.f32.mrb[0].mxu0
  %1683 = vmatprep.mubr.f32.mxu0 0.0
  %v1684 = vand.u32 %v1284, 4294901760
  %1685 = vmatmul.mubr.f32.gmra.mrb[0].mxu0 %v1684
  %v1686 = vpop.f32.mrb[0].mxu0
  %v1687 = vadd.f32 %v1446, %v1686
  %v1688 = vpop.f32.mrb[0].mxu0
  %1689 = vmatprep.mubr.f32.mxu0 0.0
  %v1690 = vand.u32 %v1287, 4294901760
  %1691 = vmatmul.mubr.f32.gmra.mrb[0].mxu0 %v1690
  %v1692 = vpop.f32.mrb[0].mxu0
  %v1693 = vadd.f32 %v1456, %v1692
  %v1694 = vpop.f32.mrb[0].mxu0
  %1695 = vmatprep.mubr.f32.mxu0 0.0
  %v1696 = vand.u32 %v1290, 4294901760
  %1697 = vmatmul.mubr.f32.gmra.mrb[0].mxu0 %v1696
  %v1698 = vpop.f32.mrb[0].mxu0
  %v1699 = vadd.f32 %v1466, %v1698
  %v1700 = vpop.f32.mrb[0].mxu0
  %1701 = vmatprep.mubr.f32.mxu0 0.0
  %v1702 = vand.u32 %v1293, 4294901760
  %1703 = vmatmul.mubr.f32.gmra.mrb[0].mxu0 %v1702
  %v1704 = vpop.f32.mrb[0].mxu0
  %v1705 = vadd.f32 %v1476, %v1704
  %v1706 = vpop.f32.mrb[0].mxu0
  %1707 = vmatprep.mubr.f32.mxu0 0.0
  %v1708 = vand.u32 %v1296, 4294901760
  %1709 = vmatmul.mubr.f32.gmra.mrb[0].mxu0 %v1708
  %v1710 = vpop.f32.mrb[0].mxu0
  %v1711 = vadd.f32 %v1486, %v1710
  %v1712 = vpop.f32.mrb[0].mxu0
  %1713 = vmatprep.mubr.f32.mxu0 0.0
  %v1714 = vand.u32 %v1299, 4294901760
  %1715 = vmatmul.mubr.f32.gmra.mrb[0].mxu0 %v1714
  %v1716 = vpop.f32.mrb[0].mxu0
  %v1717 = vadd.f32 %v1496, %v1716
  %v1718 = vpop.f32.mrb[0].mxu0
  %1719 = vmatprep.mubr.f32.mxu0 0.0
  %v1720 = vand.u32 %v1302, 4294901760
  %1721 = vmatmul.mubr.f32.gmra.mrb[0].mxu0 %v1720
  %v1722 = vpop.f32.mrb[0].mxu0
  %v1723 = vadd.f32 %v1506, %v1722
  %v1724 = vpop.f32.mrb[0].mxu0
  %1725 = vmatprep.mubr.f32.mxu0 0.0
  %v1726 = vand.u32 %v1305, 4294901760
  %1727 = vmatmul.mubr.f32.gmra.mrb[0].mxu0 %v1726
  %v1728 = vpop.f32.mrb[0].mxu0
  %v1729 = vadd.f32 %v1516, %v1728
  %v1730 = vpop.f32.mrb[0].mxu0
  %1731 = vmatprep.mubr.f32.mxu0 0.0
  %v1732 = vand.u32 %v1308, 4294901760
  %1733 = vmatmul.mubr.f32.gmra.mrb[0].mxu0 %v1732
  %v1734 = vpop.f32.mrb[0].mxu0
  %v1735 = vadd.f32 %v1526, %v1734
  %v1736 = vpop.f32.mrb[0].mxu0
  %1737 = vmatprep.mubr.f32.mxu0 0.0
  %v1738 = vand.u32 %v1311, 4294901760
  %1739 = vmatmul.mubr.f32.gmra.mrb[0].mxu0 %v1738
  %v1740 = vpop.f32.mrb[0].mxu0
  %v1741 = vadd.f32 %v1536, %v1740
  %v1742 = vpop.f32.mrb[0].mxu0
  %1743 = vmatprep.mubr.f32.mxu0 0.0
  %v1744 = vand.u32 %v1314, 4294901760
  %1745 = vmatmul.mubr.f32.gmra.mrb[0].mxu0 %v1744
  %v1746 = vpop.f32.mrb[0].mxu0
  %v1747 = vadd.f32 %v1546, %v1746
  %v1748 = vpop.f32.mrb[0].mxu0
  %1749 = vdwg.mxu0
  %1750 = vmatprep.subr.mxu0 0.0
  %v1751 = vand.u32 %v32, 4294901760
  %v1752 = vsub.f32 %v32, %v1751
  %1753 = vmatpush1.msra.mxu0 %v1752
  %1754 = vmatprep.subr.mxu0 0.0
  %v1755 = vand.u32 %v33, 4294901760
  %v1756 = vsub.f32 %v33, %v1755
  %1757 = vmatpush1.msra.mxu0 %v1756
  %1758 = vmatprep.subr.mxu0 0.0
  %v1759 = vand.u32 %v34, 4294901760
  %v1760 = vsub.f32 %v34, %v1759
  %1761 = vmatpush1.msra.mxu0 %v1760
  %1762 = vmatprep.subr.mxu0 0.0
  %v1763 = vand.u32 %v35, 4294901760
  %v1764 = vsub.f32 %v35, %v1763
  %1765 = vmatpush1.msra.mxu0 %v1764
  %1766 = vmatprep.subr.mxu0 0.0
  %v1767 = vand.u32 %v36, 4294901760
  %v1768 = vsub.f32 %v36, %v1767
  %1769 = vmatpush1.msra.mxu0 %v1768
  %1770 = vmatprep.subr.mxu0 0.0
  %v1771 = vand.u32 %v37, 4294901760
  %v1772 = vsub.f32 %v37, %v1771
  %1773 = vmatpush1.msra.mxu0 %v1772
  %1774 = vmatprep.subr.mxu0 0.0
  %v1775 = vand.u32 %v38, 4294901760
  %v1776 = vsub.f32 %v38, %v1775
  %1777 = vmatpush1.msra.mxu0 %v1776
  %1778 = vmatprep.subr.mxu0 0.0
  %v1779 = vand.u32 %v39, 4294901760
  %v1780 = vsub.f32 %v39, %v1779
  %1781 = vmatpush1.msra.mxu0 %v1780
  %1782 = vmatprep.subr.mxu0 0.0
  %1783 = vmatpush1.msra.mxu0 0.0
  %1784 = vmatprep.subr.mxu0 0.0
  %1785 = vmatpush1.msra.mxu0 0.0
  %1786 = vmatprep.subr.mxu0 0.0
  %1787 = vmatpush1.msra.mxu0 0.0
  %1788 = vmatprep.subr.mxu0 0.0
  %1789 = vmatpush1.msra.mxu0 0.0
  %1790 = vmatprep.subr.mxu0 0.0
  %1791 = vmatpush1.msra.mxu0 0.0
  %1792 = vmatprep.subr.mxu0 0.0
  %1793 = vmatpush1.msra.mxu0 0.0
  %1794 = vmatprep.subr.mxu0 0.0
  %1795 = vmatpush1.msra.mxu0 0.0
  %1796 = vmatprep.subr.mxu0 0.0
  %1797 = vmatpush1.msra.mxu0 0.0
  %1798 = vmatprep.subr.mxu0 0.0
  %1799 = vmatpush1.msra.mxu0 0.0
  %1800 = vmatprep.subr.mxu0 0.0
  %1801 = vmatpush1.msra.mxu0 0.0
  %1802 = vmatprep.subr.mxu0 0.0
  %1803 = vmatpush1.msra.mxu0 0.0
  %1804 = vmatprep.subr.mxu0 0.0
  %1805 = vmatpush1.msra.mxu0 0.0
  %1806 = vmatprep.subr.mxu0 0.0
  %1807 = vmatpush1.msra.mxu0 0.0
  %1808 = vmatprep.subr.mxu0 0.0
  %1809 = vmatpush1.msra.mxu0 0.0
  %1810 = vmatprep.subr.mxu0 0.0
  %1811 = vmatpush1.msra.mxu0 0.0
  %1812 = vmatprep.subr.mxu0 0.0
  %1813 = vmatpush1.msra.mxu0 0.0
  %1814 = vmatprep.subr.mxu0 0.0
  %1815 = vmatpush1.msra.mxu0 0.0
  %1816 = vmatprep.subr.mxu0 0.0
  %1817 = vmatpush1.msra.mxu0 0.0
  %1818 = vmatprep.subr.mxu0 0.0
  %1819 = vmatpush1.msra.mxu0 0.0
  %1820 = vmatprep.subr.mxu0 0.0
  %1821 = vmatpush1.msra.mxu0 0.0
  %1822 = vmatprep.subr.mxu0 0.0
  %1823 = vmatpush1.msra.mxu0 0.0
  %1824 = vmatprep.subr.mxu0 0.0
  %1825 = vmatpush1.msra.mxu0 0.0
  %1826 = vmatprep.subr.mxu0 0.0
  %1827 = vmatpush1.msra.mxu0 0.0
  %1828 = vmatprep.subr.mxu0 0.0
  %1829 = vmatpush1.msra.mxu0 0.0
  %1830 = vmatprep.mubr.f32.mxu0 0.0
  %v1831 = vand.u32 %v1269, 4294901760
  %v1832 = vsub.f32 %v1269, %v1831
  %1833 = vmatmul.mubr.f32.gmra.mrb[0].mxu0 %v1832
  %v1834 = vpop.f32.mrb[0].mxu0
  %v1835 = vadd.f32 %v1657, %v1834
  %v1836 = vpop.f32.mrb[0].mxu0
  %1837 = vmatprep.mubr.f32.mxu0 0.0
  %v1838 = vand.u32 %v1272, 4294901760
  %v1839 = vsub.f32 %v1272, %v1838
  %1840 = vmatmul.mubr.f32.gmra.mrb[0].mxu0 %v1839
  %v1841 = vpop.f32.mrb[0].mxu0
  %v1842 = vadd.f32 %v1663, %v1841
  %v1843 = vpop.f32.mrb[0].mxu0
  %1844 = vmatprep.mubr.f32.mxu0 0.0
  %v1845 = vand.u32 %v1275, 4294901760
  %v1846 = vsub.f32 %v1275, %v1845
  %1847 = vmatmul.mubr.f32.gmra.mrb[0].mxu0 %v1846
  %v1848 = vpop.f32.mrb[0].mxu0
  %v1849 = vadd.f32 %v1669, %v1848
  %v1850 = vpop.f32.mrb[0].mxu0
  %1851 = vmatprep.mubr.f32.mxu0 0.0
  %v1852 = vand.u32 %v1278, 4294901760
  %v1853 = vsub.f32 %v1278, %v1852
  %1854 = vmatmul.mubr.f32.gmra.mrb[0].mxu0 %v1853
  %v1855 = vpop.f32.mrb[0].mxu0
  %v1856 = vadd.f32 %v1675, %v1855
  %v1857 = vpop.f32.mrb[0].mxu0
  %1858 = vmatprep.mubr.f32.mxu0 0.0
  %v1859 = vand.u32 %v1281, 4294901760
  %v1860 = vsub.f32 %v1281, %v1859
  %1861 = vmatmul.mubr.f32.gmra.mrb[0].mxu0 %v1860
  %v1862 = vpop.f32.mrb[0].mxu0
  %v1863 = vadd.f32 %v1681, %v1862
  %v1864 = vpop.f32.mrb[0].mxu0
  %1865 = vmatprep.mubr.f32.mxu0 0.0
  %v1866 = vand.u32 %v1284, 4294901760
  %v1867 = vsub.f32 %v1284, %v1866
  %1868 = vmatmul.mubr.f32.gmra.mrb[0].mxu0 %v1867
  %v1869 = vpop.f32.mrb[0].mxu0
  %v1870 = vadd.f32 %v1687, %v1869
  %v1871 = vpop.f32.mrb[0].mxu0
  %1872 = vmatprep.mubr.f32.mxu0 0.0
  %v1873 = vand.u32 %v1287, 4294901760
  %v1874 = vsub.f32 %v1287, %v1873
  %1875 = vmatmul.mubr.f32.gmra.mrb[0].mxu0 %v1874
  %v1876 = vpop.f32.mrb[0].mxu0
  %v1877 = vadd.f32 %v1693, %v1876
  %v1878 = vpop.f32.mrb[0].mxu0
  %1879 = vmatprep.mubr.f32.mxu0 0.0
  %v1880 = vand.u32 %v1290, 4294901760
  %v1881 = vsub.f32 %v1290, %v1880
  %1882 = vmatmul.mubr.f32.gmra.mrb[0].mxu0 %v1881
  %v1883 = vpop.f32.mrb[0].mxu0
  %v1884 = vadd.f32 %v1699, %v1883
  %v1885 = vpop.f32.mrb[0].mxu0
  %1886 = vmatprep.mubr.f32.mxu0 0.0
  %v1887 = vand.u32 %v1293, 4294901760
  %v1888 = vsub.f32 %v1293, %v1887
  %1889 = vmatmul.mubr.f32.gmra.mrb[0].mxu0 %v1888
  %v1890 = vpop.f32.mrb[0].mxu0
  %v1891 = vadd.f32 %v1705, %v1890
  %v1892 = vpop.f32.mrb[0].mxu0
  %1893 = vmatprep.mubr.f32.mxu0 0.0
  %v1894 = vand.u32 %v1296, 4294901760
  %v1895 = vsub.f32 %v1296, %v1894
  %1896 = vmatmul.mubr.f32.gmra.mrb[0].mxu0 %v1895
  %v1897 = vpop.f32.mrb[0].mxu0
  %v1898 = vadd.f32 %v1711, %v1897
  %v1899 = vpop.f32.mrb[0].mxu0
  %1900 = vmatprep.mubr.f32.mxu0 0.0
  %v1901 = vand.u32 %v1299, 4294901760
  %v1902 = vsub.f32 %v1299, %v1901
  %1903 = vmatmul.mubr.f32.gmra.mrb[0].mxu0 %v1902
  %v1904 = vpop.f32.mrb[0].mxu0
  %v1905 = vadd.f32 %v1717, %v1904
  %v1906 = vpop.f32.mrb[0].mxu0
  %1907 = vmatprep.mubr.f32.mxu0 0.0
  %v1908 = vand.u32 %v1302, 4294901760
  %v1909 = vsub.f32 %v1302, %v1908
  %1910 = vmatmul.mubr.f32.gmra.mrb[0].mxu0 %v1909
  %v1911 = vpop.f32.mrb[0].mxu0
  %v1912 = vadd.f32 %v1723, %v1911
  %v1913 = vpop.f32.mrb[0].mxu0
  %1914 = vmatprep.mubr.f32.mxu0 0.0
  %v1915 = vand.u32 %v1305, 4294901760
  %v1916 = vsub.f32 %v1305, %v1915
  %1917 = vmatmul.mubr.f32.gmra.mrb[0].mxu0 %v1916
  %v1918 = vpop.f32.mrb[0].mxu0
  %v1919 = vadd.f32 %v1729, %v1918
  %v1920 = vpop.f32.mrb[0].mxu0
  %1921 = vmatprep.mubr.f32.mxu0 0.0
  %v1922 = vand.u32 %v1308, 4294901760
  %v1923 = vsub.f32 %v1308, %v1922
  %1924 = vmatmul.mubr.f32.gmra.mrb[0].mxu0 %v1923
  %v1925 = vpop.f32.mrb[0].mxu0
  %v1926 = vadd.f32 %v1735, %v1925
  %v1927 = vpop.f32.mrb[0].mxu0
  %1928 = vmatprep.mubr.f32.mxu0 0.0
  %v1929 = vand.u32 %v1311, 4294901760
  %v1930 = vsub.f32 %v1311, %v1929
  %1931 = vmatmul.mubr.f32.gmra.mrb[0].mxu0 %v1930
  %v1932 = vpop.f32.mrb[0].mxu0
  %v1933 = vadd.f32 %v1741, %v1932
  %v1934 = vpop.f32.mrb[0].mxu0
  %1935 = vmatprep.mubr.f32.mxu0 0.0
  %v1936 = vand.u32 %v1314, 4294901760
  %v1937 = vsub.f32 %v1314, %v1936
  %1938 = vmatmul.mubr.f32.gmra.mrb[0].mxu0 %v1937
  %v1939 = vpop.f32.mrb[0].mxu0
  %v1940 = vadd.f32 %v1747, %v1939
  %v1941 = vpop.f32.mrb[0].mxu0
  %1942 = vdwg.mxu0
  %1943 = vmatprep.subr.mxu0 0.0
  %v1944 = vand.u32 %v32, 4294901760
  %1945 = vmatpush1.msra.mxu0 %v1944
  %1946 = vmatprep.subr.mxu0 0.0
  %v1947 = vand.u32 %v33, 4294901760
  %1948 = vmatpush1.msra.mxu0 %v1947
  %1949 = vmatprep.subr.mxu0 0.0
  %v1950 = vand.u32 %v34, 4294901760
  %1951 = vmatpush1.msra.mxu0 %v1950
  %1952 = vmatprep.subr.mxu0 0.0
  %v1953 = vand.u32 %v35, 4294901760
  %1954 = vmatpush1.msra.mxu0 %v1953
  %1955 = vmatprep.subr.mxu0 0.0
  %v1956 = vand.u32 %v36, 4294901760
  %1957 = vmatpush1.msra.mxu0 %v1956
  %1958 = vmatprep.subr.mxu0 0.0
  %v1959 = vand.u32 %v37, 4294901760
  %1960 = vmatpush1.msra.mxu0 %v1959
  %1961 = vmatprep.subr.mxu0 0.0
  %v1962 = vand.u32 %v38, 4294901760
  %1963 = vmatpush1.msra.mxu0 %v1962
  %1964 = vmatprep.subr.mxu0 0.0
  %v1965 = vand.u32 %v39, 4294901760
  %1966 = vmatpush1.msra.mxu0 %v1965
  %1967 = vmatprep.subr.mxu0 0.0
  %1968 = vmatpush1.msra.mxu0 0.0
  %1969 = vmatprep.subr.mxu0 0.0
  %1970 = vmatpush1.msra.mxu0 0.0
  %1971 = vmatprep.subr.mxu0 0.0
  %1972 = vmatpush1.msra.mxu0 0.0
  %1973 = vmatprep.subr.mxu0 0.0
  %1974 = vmatpush1.msra.mxu0 0.0
  %1975 = vmatprep.subr.mxu0 0.0
  %1976 = vmatpush1.msra.mxu0 0.0
  %1977 = vmatprep.subr.mxu0 0.0
  %1978 = vmatpush1.msra.mxu0 0.0
  %1979 = vmatprep.subr.mxu0 0.0
  %1980 = vmatpush1.msra.mxu0 0.0
  %1981 = vmatprep.subr.mxu0 0.0
  %1982 = vmatpush1.msra.mxu0 0.0
  %1983 = vmatprep.subr.mxu0 0.0
  %1984 = vmatpush1.msra.mxu0 0.0
  %1985 = vmatprep.subr.mxu0 0.0
  %1986 = vmatpush1.msra.mxu0 0.0
  %1987 = vmatprep.subr.mxu0 0.0
  %1988 = vmatpush1.msra.mxu0 0.0
  %1989 = vmatprep.subr.mxu0 0.0
  %1990 = vmatpush1.msra.mxu0 0.0
  %1991 = vmatprep.subr.mxu0 0.0
  %1992 = vmatpush1.msra.mxu0 0.0
  %1993 = vmatprep.subr.mxu0 0.0
  %1994 = vmatpush1.msra.mxu0 0.0
  %1995 = vmatprep.subr.mxu0 0.0
  %1996 = vmatpush1.msra.mxu0 0.0
  %1997 = vmatprep.subr.mxu0 0.0
  %1998 = vmatpush1.msra.mxu0 0.0
  %1999 = vmatprep.subr.mxu0 0.0
  %2000 = vmatpush1.msra.mxu0 0.0
  %2001 = vmatprep.subr.mxu0 0.0
  %2002 = vmatpush1.msra.mxu0 0.0
  %2003 = vmatprep.subr.mxu0 0.0
  %2004 = vmatpush1.msra.mxu0 0.0
  %2005 = vmatprep.subr.mxu0 0.0
  %2006 = vmatpush1.msra.mxu0 0.0
  %2007 = vmatprep.subr.mxu0 0.0
  %2008 = vmatpush1.msra.mxu0 0.0
  %2009 = vmatprep.subr.mxu0 0.0
  %2010 = vmatpush1.msra.mxu0 0.0
  %2011 = vmatprep.subr.mxu0 0.0
  %2012 = vmatpush1.msra.mxu0 0.0
  %2013 = vmatprep.subr.mxu0 0.0
  %2014 = vmatpush1.msra.mxu0 0.0
  %2015 = vmatprep.mubr.f32.mxu0 0.0
  %v2016 = vand.u32 %v1269, 4294901760
  %v2017 = vsub.f32 %v1269, %v2016
  %v2018 = vand.u32 %v2017, 4294901760
  %2019 = vmatmul.mubr.f32.gmra.mrb[0].mxu0 %v2018
  %v2020 = vpop.f32.mrb[0].mxu0
  %v2021 = vadd.f32 %v1835, %v2020
  %v2022 = vpop.f32.mrb[0].mxu0
  %2023 = vmatprep.mubr.f32.mxu0 0.0
  %v2024 = vand.u32 %v1272, 4294901760
  %v2025 = vsub.f32 %v1272, %v2024
  %v2026 = vand.u32 %v2025, 4294901760
  %2027 = vmatmul.mubr.f32.gmra.mrb[0].mxu0 %v2026
  %v2028 = vpop.f32.mrb[0].mxu0
  %v2029 = vadd.f32 %v1842, %v2028
  %v2030 = vpop.f32.mrb[0].mxu0
  %2031 = vmatprep.mubr.f32.mxu0 0.0
  %v2032 = vand.u32 %v1275, 4294901760
  %v2033 = vsub.f32 %v1275, %v2032
  %v2034 = vand.u32 %v2033, 4294901760
  %2035 = vmatmul.mubr.f32.gmra.mrb[0].mxu0 %v2034
  %v2036 = vpop.f32.mrb[0].mxu0
  %v2037 = vadd.f32 %v1849, %v2036
  %v2038 = vpop.f32.mrb[0].mxu0
  %2039 = vmatprep.mubr.f32.mxu0 0.0
  %v2040 = vand.u32 %v1278, 4294901760
  %v2041 = vsub.f32 %v1278, %v2040
  %v2042 = vand.u32 %v2041, 4294901760
  %2043 = vmatmul.mubr.f32.gmra.mrb[0].mxu0 %v2042
  %v2044 = vpop.f32.mrb[0].mxu0
  %v2045 = vadd.f32 %v1856, %v2044
  %v2046 = vpop.f32.mrb[0].mxu0
  %2047 = vmatprep.mubr.f32.mxu0 0.0
  %v2048 = vand.u32 %v1281, 4294901760
  %v2049 = vsub.f32 %v1281, %v2048
  %v2050 = vand.u32 %v2049, 4294901760
  %2051 = vmatmul.mubr.f32.gmra.mrb[0].mxu0 %v2050
  %v2052 = vpop.f32.mrb[0].mxu0
  %v2053 = vadd.f32 %v1863, %v2052
  %v2054 = vpop.f32.mrb[0].mxu0
  %2055 = vmatprep.mubr.f32.mxu0 0.0
  %v2056 = vand.u32 %v1284, 4294901760
  %v2057 = vsub.f32 %v1284, %v2056
  %v2058 = vand.u32 %v2057, 4294901760
  %2059 = vmatmul.mubr.f32.gmra.mrb[0].mxu0 %v2058
  %v2060 = vpop.f32.mrb[0].mxu0
  %v2061 = vadd.f32 %v1870, %v2060
  %v2062 = vpop.f32.mrb[0].mxu0
  %2063 = vmatprep.mubr.f32.mxu0 0.0
  %v2064 = vand.u32 %v1287, 4294901760
  %v2065 = vsub.f32 %v1287, %v2064
  %v2066 = vand.u32 %v2065, 4294901760
  %2067 = vmatmul.mubr.f32.gmra.mrb[0].mxu0 %v2066
  %v2068 = vpop.f32.mrb[0].mxu0
  %v2069 = vadd.f32 %v1877, %v2068
  %v2070 = vpop.f32.mrb[0].mxu0
  %2071 = vmatprep.mubr.f32.mxu0 0.0
  %v2072 = vand.u32 %v1290, 4294901760
  %v2073 = vsub.f32 %v1290, %v2072
  %v2074 = vand.u32 %v2073, 4294901760
  %2075 = vmatmul.mubr.f32.gmra.mrb[0].mxu0 %v2074
  %v2076 = vpop.f32.mrb[0].mxu0
  %v2077 = vadd.f32 %v1884, %v2076
  %v2078 = vpop.f32.mrb[0].mxu0
  %2079 = vmatprep.mubr.f32.mxu0 0.0
  %v2080 = vand.u32 %v1293, 4294901760
  %v2081 = vsub.f32 %v1293, %v2080
  %v2082 = vand.u32 %v2081, 4294901760
  %2083 = vmatmul.mubr.f32.gmra.mrb[0].mxu0 %v2082
  %v2084 = vpop.f32.mrb[0].mxu0
  %v2085 = vadd.f32 %v1891, %v2084
  %v2086 = vpop.f32.mrb[0].mxu0
  %2087 = vmatprep.mubr.f32.mxu0 0.0
  %v2088 = vand.u32 %v1296, 4294901760
  %v2089 = vsub.f32 %v1296, %v2088
  %v2090 = vand.u32 %v2089, 4294901760
  %2091 = vmatmul.mubr.f32.gmra.mrb[0].mxu0 %v2090
  %v2092 = vpop.f32.mrb[0].mxu0
  %v2093 = vadd.f32 %v1898, %v2092
  %v2094 = vpop.f32.mrb[0].mxu0
  %2095 = vmatprep.mubr.f32.mxu0 0.0
  %v2096 = vand.u32 %v1299, 4294901760
  %v2097 = vsub.f32 %v1299, %v2096
  %v2098 = vand.u32 %v2097, 4294901760
  %2099 = vmatmul.mubr.f32.gmra.mrb[0].mxu0 %v2098
  %v2100 = vpop.f32.mrb[0].mxu0
  %v2101 = vadd.f32 %v1905, %v2100
  %v2102 = vpop.f32.mrb[0].mxu0
  %2103 = vmatprep.mubr.f32.mxu0 0.0
  %v2104 = vand.u32 %v1302, 4294901760
  %v2105 = vsub.f32 %v1302, %v2104
  %v2106 = vand.u32 %v2105, 4294901760
  %2107 = vmatmul.mubr.f32.gmra.mrb[0].mxu0 %v2106
  %v2108 = vpop.f32.mrb[0].mxu0
  %v2109 = vadd.f32 %v1912, %v2108
  %v2110 = vpop.f32.mrb[0].mxu0
  %2111 = vmatprep.mubr.f32.mxu0 0.0
  %v2112 = vand.u32 %v1305, 4294901760
  %v2113 = vsub.f32 %v1305, %v2112
  %v2114 = vand.u32 %v2113, 4294901760
  %2115 = vmatmul.mubr.f32.gmra.mrb[0].mxu0 %v2114
  %v2116 = vpop.f32.mrb[0].mxu0
  %v2117 = vadd.f32 %v1919, %v2116
  %v2118 = vpop.f32.mrb[0].mxu0
  %2119 = vmatprep.mubr.f32.mxu0 0.0
  %v2120 = vand.u32 %v1308, 4294901760
  %v2121 = vsub.f32 %v1308, %v2120
  %v2122 = vand.u32 %v2121, 4294901760
  %2123 = vmatmul.mubr.f32.gmra.mrb[0].mxu0 %v2122
  %v2124 = vpop.f32.mrb[0].mxu0
  %v2125 = vadd.f32 %v1926, %v2124
  %v2126 = vpop.f32.mrb[0].mxu0
  %2127 = vmatprep.mubr.f32.mxu0 0.0
  %v2128 = vand.u32 %v1311, 4294901760
  %v2129 = vsub.f32 %v1311, %v2128
  %v2130 = vand.u32 %v2129, 4294901760
  %2131 = vmatmul.mubr.f32.gmra.mrb[0].mxu0 %v2130
  %v2132 = vpop.f32.mrb[0].mxu0
  %v2133 = vadd.f32 %v1933, %v2132
  %v2134 = vpop.f32.mrb[0].mxu0
  %2135 = vmatprep.mubr.f32.mxu0 0.0
  %v2136 = vand.u32 %v1314, 4294901760
  %v2137 = vsub.f32 %v1314, %v2136
  %v2138 = vand.u32 %v2137, 4294901760
  %2139 = vmatmul.mubr.f32.gmra.mrb[0].mxu0 %v2138
  %v2140 = vpop.f32.mrb[0].mxu0
  %v2141 = vadd.f32 %v1940, %v2140
  %v2142 = vpop.f32.mrb[0].mxu0
  %2143 = vdwg.mxu0
  %2144 = vmatprep.subr.mxu0 0.0
  %v2145 = vand.u32 %v32, 4294901760
  %v2146 = vsub.f32 %v32, %v2145
  %v2147 = vand.u32 %v2146, 4294901760
  %2148 = vmatpush1.msra.mxu0 %v2147
  %2149 = vmatprep.subr.mxu0 0.0
  %v2150 = vand.u32 %v33, 4294901760
  %v2151 = vsub.f32 %v33, %v2150
  %v2152 = vand.u32 %v2151, 4294901760
  %2153 = vmatpush1.msra.mxu0 %v2152
  %2154 = vmatprep.subr.mxu0 0.0
  %v2155 = vand.u32 %v34, 4294901760
  %v2156 = vsub.f32 %v34, %v2155
  %v2157 = vand.u32 %v2156, 4294901760
  %2158 = vmatpush1.msra.mxu0 %v2157
  %2159 = vmatprep.subr.mxu0 0.0
  %v2160 = vand.u32 %v35, 4294901760
  %v2161 = vsub.f32 %v35, %v2160
  %v2162 = vand.u32 %v2161, 4294901760
  %2163 = vmatpush1.msra.mxu0 %v2162
  %2164 = vmatprep.subr.mxu0 0.0
  %v2165 = vand.u32 %v36, 4294901760
  %v2166 = vsub.f32 %v36, %v2165
  %v2167 = vand.u32 %v2166, 4294901760
  %2168 = vmatpush1.msra.mxu0 %v2167
  %2169 = vmatprep.subr.mxu0 0.0
  %v2170 = vand.u32 %v37, 4294901760
  %v2171 = vsub.f32 %v37, %v2170
  %v2172 = vand.u32 %v2171, 4294901760
  %2173 = vmatpush1.msra.mxu0 %v2172
  %2174 = vmatprep.subr.mxu0 0.0
  %v2175 = vand.u32 %v38, 4294901760
  %v2176 = vsub.f32 %v38, %v2175
  %v2177 = vand.u32 %v2176, 4294901760
  %2178 = vmatpush1.msra.mxu0 %v2177
  %2179 = vmatprep.subr.mxu0 0.0
  %v2180 = vand.u32 %v39, 4294901760
  %v2181 = vsub.f32 %v39, %v2180
  %v2182 = vand.u32 %v2181, 4294901760
  %2183 = vmatpush1.msra.mxu0 %v2182
  %2184 = vmatprep.subr.mxu0 0.0
  %2185 = vmatpush1.msra.mxu0 0.0
  %2186 = vmatprep.subr.mxu0 0.0
  %2187 = vmatpush1.msra.mxu0 0.0
  %2188 = vmatprep.subr.mxu0 0.0
  %2189 = vmatpush1.msra.mxu0 0.0
  %2190 = vmatprep.subr.mxu0 0.0
  %2191 = vmatpush1.msra.mxu0 0.0
  %2192 = vmatprep.subr.mxu0 0.0
  %2193 = vmatpush1.msra.mxu0 0.0
  %2194 = vmatprep.subr.mxu0 0.0
  %2195 = vmatpush1.msra.mxu0 0.0
  %2196 = vmatprep.subr.mxu0 0.0
  %2197 = vmatpush1.msra.mxu0 0.0
  %2198 = vmatprep.subr.mxu0 0.0
  %2199 = vmatpush1.msra.mxu0 0.0
  %2200 = vmatprep.subr.mxu0 0.0
  %2201 = vmatpush1.msra.mxu0 0.0
  %2202 = vmatprep.subr.mxu0 0.0
  %2203 = vmatpush1.msra.mxu0 0.0
  %2204 = vmatprep.subr.mxu0 0.0
  %2205 = vmatpush1.msra.mxu0 0.0
  %2206 = vmatprep.subr.mxu0 0.0
  %2207 = vmatpush1.msra.mxu0 0.0
  %2208 = vmatprep.subr.mxu0 0.0
  %2209 = vmatpush1.msra.mxu0 0.0
  %2210 = vmatprep.subr.mxu0 0.0
  %2211 = vmatpush1.msra.mxu0 0.0
  %2212 = vmatprep.subr.mxu0 0.0
  %2213 = vmatpush1.msra.mxu0 0.0
  %2214 = vmatprep.subr.mxu0 0.0
  %2215 = vmatpush1.msra.mxu0 0.0
  %2216 = vmatprep.subr.mxu0 0.0
  %2217 = vmatpush1.msra.mxu0 0.0
  %2218 = vmatprep.subr.mxu0 0.0
  %2219 = vmatpush1.msra.mxu0 0.0
  %2220 = vmatprep.subr.mxu0 0.0
  %2221 = vmatpush1.msra.mxu0 0.0
  %2222 = vmatprep.subr.mxu0 0.0
  %2223 = vmatpush1.msra.mxu0 0.0
  %2224 = vmatprep.subr.mxu0 0.0
  %2225 = vmatpush1.msra.mxu0 0.0
  %2226 = vmatprep.subr.mxu0 0.0
  %2227 = vmatpush1.msra.mxu0 0.0
  %2228 = vmatprep.subr.mxu0 0.0
  %2229 = vmatpush1.msra.mxu0 0.0
  %2230 = vmatprep.subr.mxu0 0.0
  %2231 = vmatpush1.msra.mxu0 0.0
  %2232 = vmatprep.mubr.f32.mxu0 0.0
  %v2233 = vand.u32 %v1269, 4294901760
  %2234 = vmatmul.mubr.f32.gmra.mrb[0].mxu0 %v2233
  %v2235 = vpop.f32.mrb[0].mxu0
  %v2236 = vadd.f32 %v2021, %v2235
  %v2237 = vpop.f32.mrb[0].mxu0
  %2238 = vmatprep.mubr.f32.mxu0 0.0
  %v2239 = vand.u32 %v1272, 4294901760
  %2240 = vmatmul.mubr.f32.gmra.mrb[0].mxu0 %v2239
  %v2241 = vpop.f32.mrb[0].mxu0
  %v2242 = vadd.f32 %v2029, %v2241
  %v2243 = vpop.f32.mrb[0].mxu0
  %2244 = vmatprep.mubr.f32.mxu0 0.0
  %v2245 = vand.u32 %v1275, 4294901760
  %2246 = vmatmul.mubr.f32.gmra.mrb[0].mxu0 %v2245
  %v2247 = vpop.f32.mrb[0].mxu0
  %v2248 = vadd.f32 %v2037, %v2247
  %v2249 = vpop.f32.mrb[0].mxu0
  %2250 = vmatprep.mubr.f32.mxu0 0.0
  %v2251 = vand.u32 %v1278, 4294901760
  %2252 = vmatmul.mubr.f32.gmra.mrb[0].mxu0 %v2251
  %v2253 = vpop.f32.mrb[0].mxu0
  %v2254 = vadd.f32 %v2045, %v2253
  %v2255 = vpop.f32.mrb[0].mxu0
  %2256 = vmatprep.mubr.f32.mxu0 0.0
  %v2257 = vand.u32 %v1281, 4294901760
  %2258 = vmatmul.mubr.f32.gmra.mrb[0].mxu0 %v2257
  %v2259 = vpop.f32.mrb[0].mxu0
  %v2260 = vadd.f32 %v2053, %v2259
  %v2261 = vpop.f32.mrb[0].mxu0
  %2262 = vmatprep.mubr.f32.mxu0 0.0
  %v2263 = vand.u32 %v1284, 4294901760
  %2264 = vmatmul.mubr.f32.gmra.mrb[0].mxu0 %v2263
  %v2265 = vpop.f32.mrb[0].mxu0
  %v2266 = vadd.f32 %v2061, %v2265
  %v2267 = vpop.f32.mrb[0].mxu0
  %2268 = vmatprep.mubr.f32.mxu0 0.0
  %v2269 = vand.u32 %v1287, 4294901760
  %2270 = vmatmul.mubr.f32.gmra.mrb[0].mxu0 %v2269
  %v2271 = vpop.f32.mrb[0].mxu0
  %v2272 = vadd.f32 %v2069, %v2271
  %v2273 = vpop.f32.mrb[0].mxu0
  %2274 = vmatprep.mubr.f32.mxu0 0.0
  %v2275 = vand.u32 %v1290, 4294901760
  %2276 = vmatmul.mubr.f32.gmra.mrb[0].mxu0 %v2275
  %v2277 = vpop.f32.mrb[0].mxu0
  %v2278 = vadd.f32 %v2077, %v2277
  %v2279 = vpop.f32.mrb[0].mxu0
  %2280 = vmatprep.mubr.f32.mxu0 0.0
  %v2281 = vand.u32 %v1293, 4294901760
  %2282 = vmatmul.mubr.f32.gmra.mrb[0].mxu0 %v2281
  %v2283 = vpop.f32.mrb[0].mxu0
  %v2284 = vadd.f32 %v2085, %v2283
  %v2285 = vpop.f32.mrb[0].mxu0
  %2286 = vmatprep.mubr.f32.mxu0 0.0
  %v2287 = vand.u32 %v1296, 4294901760
  %2288 = vmatmul.mubr.f32.gmra.mrb[0].mxu0 %v2287
  %v2289 = vpop.f32.mrb[0].mxu0
  %v2290 = vadd.f32 %v2093, %v2289
  %v2291 = vpop.f32.mrb[0].mxu0
  %2292 = vmatprep.mubr.f32.mxu0 0.0
  %v2293 = vand.u32 %v1299, 4294901760
  %2294 = vmatmul.mubr.f32.gmra.mrb[0].mxu0 %v2293
  %v2295 = vpop.f32.mrb[0].mxu0
  %v2296 = vadd.f32 %v2101, %v2295
  %v2297 = vpop.f32.mrb[0].mxu0
  %2298 = vmatprep.mubr.f32.mxu0 0.0
  %v2299 = vand.u32 %v1302, 4294901760
  %2300 = vmatmul.mubr.f32.gmra.mrb[0].mxu0 %v2299
  %v2301 = vpop.f32.mrb[0].mxu0
  %v2302 = vadd.f32 %v2109, %v2301
  %v2303 = vpop.f32.mrb[0].mxu0
  %2304 = vmatprep.mubr.f32.mxu0 0.0
  %v2305 = vand.u32 %v1305, 4294901760
  %2306 = vmatmul.mubr.f32.gmra.mrb[0].mxu0 %v2305
  %v2307 = vpop.f32.mrb[0].mxu0
  %v2308 = vadd.f32 %v2117, %v2307
  %v2309 = vpop.f32.mrb[0].mxu0
  %2310 = vmatprep.mubr.f32.mxu0 0.0
  %v2311 = vand.u32 %v1308, 4294901760
  %2312 = vmatmul.mubr.f32.gmra.mrb[0].mxu0 %v2311
  %v2313 = vpop.f32.mrb[0].mxu0
  %v2314 = vadd.f32 %v2125, %v2313
  %v2315 = vpop.f32.mrb[0].mxu0
  %2316 = vmatprep.mubr.f32.mxu0 0.0
  %v2317 = vand.u32 %v1311, 4294901760
  %2318 = vmatmul.mubr.f32.gmra.mrb[0].mxu0 %v2317
  %v2319 = vpop.f32.mrb[0].mxu0
  %v2320 = vadd.f32 %v2133, %v2319
  %v2321 = vpop.f32.mrb[0].mxu0
  %2322 = vmatprep.mubr.f32.mxu0 0.0
  %v2323 = vand.u32 %v1314, 4294901760
  %2324 = vmatmul.mubr.f32.gmra.mrb[0].mxu0 %v2323
  %v2325 = vpop.f32.mrb[0].mxu0
  %v2326 = vadd.f32 %v2141, %v2325
  %v2327 = vpop.f32.mrb[0].mxu0
  %2328 = vdwg.mxu0
  %2329 = vmatprep.subr.mxu0 0.0
  %v2330 = vand.u32 %v32, 4294901760
  %2331 = vmatpush1.msra.mxu0 %v2330
  %2332 = vmatprep.subr.mxu0 0.0
  %v2333 = vand.u32 %v33, 4294901760
  %2334 = vmatpush1.msra.mxu0 %v2333
  %2335 = vmatprep.subr.mxu0 0.0
  %v2336 = vand.u32 %v34, 4294901760
  %2337 = vmatpush1.msra.mxu0 %v2336
  %2338 = vmatprep.subr.mxu0 0.0
  %v2339 = vand.u32 %v35, 4294901760
  %2340 = vmatpush1.msra.mxu0 %v2339
  %2341 = vmatprep.subr.mxu0 0.0
  %v2342 = vand.u32 %v36, 4294901760
  %2343 = vmatpush1.msra.mxu0 %v2342
  %2344 = vmatprep.subr.mxu0 0.0
  %v2345 = vand.u32 %v37, 4294901760
  %2346 = vmatpush1.msra.mxu0 %v2345
  %2347 = vmatprep.subr.mxu0 0.0
  %v2348 = vand.u32 %v38, 4294901760
  %2349 = vmatpush1.msra.mxu0 %v2348
  %2350 = vmatprep.subr.mxu0 0.0
  %v2351 = vand.u32 %v39, 4294901760
  %2352 = vmatpush1.msra.mxu0 %v2351
  %2353 = vmatprep.subr.mxu0 0.0
  %2354 = vmatpush1.msra.mxu0 0.0
  %2355 = vmatprep.subr.mxu0 0.0
  %2356 = vmatpush1.msra.mxu0 0.0
  %2357 = vmatprep.subr.mxu0 0.0
  %2358 = vmatpush1.msra.mxu0 0.0
  %2359 = vmatprep.subr.mxu0 0.0
  %2360 = vmatpush1.msra.mxu0 0.0
  %2361 = vmatprep.subr.mxu0 0.0
  %2362 = vmatpush1.msra.mxu0 0.0
  %2363 = vmatprep.subr.mxu0 0.0
  %2364 = vmatpush1.msra.mxu0 0.0
  %2365 = vmatprep.subr.mxu0 0.0
  %2366 = vmatpush1.msra.mxu0 0.0
  %2367 = vmatprep.subr.mxu0 0.0
  %2368 = vmatpush1.msra.mxu0 0.0
  %2369 = vmatprep.subr.mxu0 0.0
  %2370 = vmatpush1.msra.mxu0 0.0
  %2371 = vmatprep.subr.mxu0 0.0
  %2372 = vmatpush1.msra.mxu0 0.0
  %2373 = vmatprep.subr.mxu0 0.0
  %2374 = vmatpush1.msra.mxu0 0.0
  %2375 = vmatprep.subr.mxu0 0.0
  %2376 = vmatpush1.msra.mxu0 0.0
  %2377 = vmatprep.subr.mxu0 0.0
  %2378 = vmatpush1.msra.mxu0 0.0
  %2379 = vmatprep.subr.mxu0 0.0
  %2380 = vmatpush1.msra.mxu0 0.0
  %2381 = vmatprep.subr.mxu0 0.0
  %2382 = vmatpush1.msra.mxu0 0.0
  %2383 = vmatprep.subr.mxu0 0.0
  %2384 = vmatpush1.msra.mxu0 0.0
  %2385 = vmatprep.subr.mxu0 0.0
  %2386 = vmatpush1.msra.mxu0 0.0
  %2387 = vmatprep.subr.mxu0 0.0
  %2388 = vmatpush1.msra.mxu0 0.0
  %2389 = vmatprep.subr.mxu0 0.0
  %2390 = vmatpush1.msra.mxu0 0.0
  %2391 = vmatprep.subr.mxu0 0.0
  %2392 = vmatpush1.msra.mxu0 0.0
  %2393 = vmatprep.subr.mxu0 0.0
  %2394 = vmatpush1.msra.mxu0 0.0
  %2395 = vmatprep.subr.mxu0 0.0
  %2396 = vmatpush1.msra.mxu0 0.0
  %2397 = vmatprep.subr.mxu0 0.0
  %2398 = vmatpush1.msra.mxu0 0.0
  %2399 = vmatprep.subr.mxu0 0.0
  %2400 = vmatpush1.msra.mxu0 0.0
  %2401 = vmatprep.mubr.f32.mxu0 0.0
  %v2402 = vand.u32 %v1269, 4294901760
  %2403 = vmatmul.mubr.f32.gmra.mrb[0].mxu0 %v2402
  %v2404 = vpop.f32.mrb[0].mxu0
  %v2405 = vadd.f32 %v2236, %v2404
  %v2406 = vpop.f32.mrb[0].mxu0
  %2407 = vmatprep.mubr.f32.mxu0 0.0
  %v2408 = vand.u32 %v1272, 4294901760
  %2409 = vmatmul.mubr.f32.gmra.mrb[0].mxu0 %v2408
  %v2410 = vpop.f32.mrb[0].mxu0
  %v2411 = vadd.f32 %v2242, %v2410
  %v2412 = vpop.f32.mrb[0].mxu0
  %2413 = vmatprep.mubr.f32.mxu0 0.0
  %v2414 = vand.u32 %v1275, 4294901760
  %2415 = vmatmul.mubr.f32.gmra.mrb[0].mxu0 %v2414
  %v2416 = vpop.f32.mrb[0].mxu0
  %v2417 = vadd.f32 %v2248, %v2416
  %v2418 = vpop.f32.mrb[0].mxu0
  %2419 = vmatprep.mubr.f32.mxu0 0.0
  %v2420 = vand.u32 %v1278, 4294901760
  %2421 = vmatmul.mubr.f32.gmra.mrb[0].mxu0 %v2420
  %v2422 = vpop.f32.mrb[0].mxu0
  %v2423 = vadd.f32 %v2254, %v2422
  %v2424 = vpop.f32.mrb[0].mxu0
  %2425 = vmatprep.mubr.f32.mxu0 0.0
  %v2426 = vand.u32 %v1281, 4294901760
  %2427 = vmatmul.mubr.f32.gmra.mrb[0].mxu0 %v2426
  %v2428 = vpop.f32.mrb[0].mxu0
  %v2429 = vadd.f32 %v2260, %v2428
  %v2430 = vpop.f32.mrb[0].mxu0
  %2431 = vmatprep.mubr.f32.mxu0 0.0
  %v2432 = vand.u32 %v1284, 4294901760
  %2433 = vmatmul.mubr.f32.gmra.mrb[0].mxu0 %v2432
  %v2434 = vpop.f32.mrb[0].mxu0
  %v2435 = vadd.f32 %v2266, %v2434
  %v2436 = vpop.f32.mrb[0].mxu0
  %2437 = vmatprep.mubr.f32.mxu0 0.0
  %v2438 = vand.u32 %v1287, 4294901760
  %2439 = vmatmul.mubr.f32.gmra.mrb[0].mxu0 %v2438
  %v2440 = vpop.f32.mrb[0].mxu0
  %v2441 = vadd.f32 %v2272, %v2440
  %v2442 = vpop.f32.mrb[0].mxu0
  %2443 = vmatprep.mubr.f32.mxu0 0.0
  %v2444 = vand.u32 %v1290, 4294901760
  %2445 = vmatmul.mubr.f32.gmra.mrb[0].mxu0 %v2444
  %v2446 = vpop.f32.mrb[0].mxu0
  %v2447 = vadd.f32 %v2278, %v2446
  %v2448 = vpop.f32.mrb[0].mxu0
  %2449 = vmatprep.mubr.f32.mxu0 0.0
  %v2450 = vand.u32 %v1293, 4294901760
  %2451 = vmatmul.mubr.f32.gmra.mrb[0].mxu0 %v2450
  %v2452 = vpop.f32.mrb[0].mxu0
  %v2453 = vadd.f32 %v2284, %v2452
  %v2454 = vpop.f32.mrb[0].mxu0
  %2455 = vmatprep.mubr.f32.mxu0 0.0
  %v2456 = vand.u32 %v1296, 4294901760
  %2457 = vmatmul.mubr.f32.gmra.mrb[0].mxu0 %v2456
  %v2458 = vpop.f32.mrb[0].mxu0
  %v2459 = vadd.f32 %v2290, %v2458
  %v2460 = vpop.f32.mrb[0].mxu0
  %2461 = vmatprep.mubr.f32.mxu0 0.0
  %v2462 = vand.u32 %v1299, 4294901760
  %2463 = vmatmul.mubr.f32.gmra.mrb[0].mxu0 %v2462
  %v2464 = vpop.f32.mrb[0].mxu0
  %v2465 = vadd.f32 %v2296, %v2464
  %v2466 = vpop.f32.mrb[0].mxu0
  %2467 = vmatprep.mubr.f32.mxu0 0.0
  %v2468 = vand.u32 %v1302, 4294901760
  %2469 = vmatmul.mubr.f32.gmra.mrb[0].mxu0 %v2468
  %v2470 = vpop.f32.mrb[0].mxu0
  %v2471 = vadd.f32 %v2302, %v2470
  %v2472 = vpop.f32.mrb[0].mxu0
  %2473 = vmatprep.mubr.f32.mxu0 0.0
  %v2474 = vand.u32 %v1305, 4294901760
  %2475 = vmatmul.mubr.f32.gmra.mrb[0].mxu0 %v2474
  %v2476 = vpop.f32.mrb[0].mxu0
  %v2477 = vadd.f32 %v2308, %v2476
  %v2478 = vpop.f32.mrb[0].mxu0
  %2479 = vmatprep.mubr.f32.mxu0 0.0
  %v2480 = vand.u32 %v1308, 4294901760
  %2481 = vmatmul.mubr.f32.gmra.mrb[0].mxu0 %v2480
  %v2482 = vpop.f32.mrb[0].mxu0
  %v2483 = vadd.f32 %v2314, %v2482
  %v2484 = vpop.f32.mrb[0].mxu0
  %2485 = vmatprep.mubr.f32.mxu0 0.0
  %v2486 = vand.u32 %v1311, 4294901760
  %2487 = vmatmul.mubr.f32.gmra.mrb[0].mxu0 %v2486
  %v2488 = vpop.f32.mrb[0].mxu0
  %v2489 = vadd.f32 %v2320, %v2488
  %v2490 = vpop.f32.mrb[0].mxu0
  %2491 = vmatprep.mubr.f32.mxu0 0.0
  %v2492 = vand.u32 %v1314, 4294901760
  %2493 = vmatmul.mubr.f32.gmra.mrb[0].mxu0 %v2492
  %v2494 = vpop.f32.mrb[0].mxu0
  %v2495 = vadd.f32 %v2326, %v2494
  %v2496 = vpop.f32.mrb[0].mxu0
  %2497 = vdwg.mxu0
  %v2498 = vmax.f32 %v2405, 0.0
  %v2499 = vmax.f32 %v2411, 0.0
  %v2500 = vmax.f32 %v2417, 0.0
  %v2501 = vmax.f32 %v2423, 0.0
  %v2502 = vmax.f32 %v2429, 0.0
  %v2503 = vmax.f32 %v2435, 0.0
  %v2504 = vmax.f32 %v2441, 0.0
  %v2505 = vmax.f32 %v2447, 0.0
  %v2506 = vmax.f32 %v2453, 0.0
  %v2507 = vmax.f32 %v2459, 0.0
  %v2508 = vmax.f32 %v2465, 0.0
  %v2509 = vmax.f32 %v2471, 0.0
  %v2510 = vmax.f32 %v2477, 0.0
  %v2511 = vmax.f32 %v2483, 0.0
  %v2512 = vmax.f32 %v2489, 0.0
  %v2513 = vmax.f32 %v2495, 0.0
  %v2515 = vlaneseq
  %v2516 = vshrl.u32 %v2515, 7
  %v2517 = vsub.s32 0, %v2516
  %v2518 = vrot.slane %v42, %v2517
  %v2520 = vmul.f32 %v2498, %v2518
  %v2521 = vmul.f32 %v2499, %v2518
  %v2522 = vmul.f32 %v2500, %v2518
  %v2523 = vmul.f32 %v2501, %v2518
  %v2524 = vmul.f32 %v2502, %v2518
  %v2525 = vmul.f32 %v2503, %v2518
  %v2526 = vmul.f32 %v2504, %v2518
  %v2527 = vmul.f32 %v2505, %v2518
  %v2528 = vmul.f32 %v2506, %v2518
  %v2529 = vmul.f32 %v2507, %v2518
  %v2530 = vmul.f32 %v2508, %v2518
  %v2531 = vmul.f32 %v2509, %v2518
  %v2532 = vmul.f32 %v2510, %v2518
  %v2533 = vmul.f32 %v2511, %v2518
  %v2534 = vmul.f32 %v2512, %v2518
  %v2535 = vmul.f32 %v2513, %v2518
  %v2536 = vsel %vm1267, %v2520, 0.0
  %2537 = vadd.xlane.f32.xlu0 %v2536
  %v2538 = vpop.xlane.xlu0 %2537
  %v2539 = vsel %vm1267, %v2521, 0.0
  %2540 = vadd.xlane.f32.xlu0 %v2539
  %v2541 = vpop.xlane.xlu0 %2540
  %v2542 = vsel %vm1267, %v2522, 0.0
  %2543 = vadd.xlane.f32.xlu0 %v2542
  %v2544 = vpop.xlane.xlu0 %2543
  %v2545 = vsel %vm1267, %v2523, 0.0
  %2546 = vadd.xlane.f32.xlu0 %v2545
  %v2547 = vpop.xlane.xlu0 %2546
  %v2548 = vsel %vm1267, %v2524, 0.0
  %2549 = vadd.xlane.f32.xlu0 %v2548
  %v2550 = vpop.xlane.xlu0 %2549
  %v2551 = vsel %vm1267, %v2525, 0.0
  %2552 = vadd.xlane.f32.xlu0 %v2551
  %v2553 = vpop.xlane.xlu0 %2552
  %v2554 = vsel %vm1267, %v2526, 0.0
  %2555 = vadd.xlane.f32.xlu0 %v2554
  %v2556 = vpop.xlane.xlu0 %2555
  %v2557 = vsel %vm1267, %v2527, 0.0
  %2558 = vadd.xlane.f32.xlu0 %v2557
  %v2559 = vpop.xlane.xlu0 %2558
  %v2560 = vsel %vm1267, %v2528, 0.0
  %2561 = vadd.xlane.f32.xlu0 %v2560
  %v2562 = vpop.xlane.xlu0 %2561
  %v2563 = vsel %vm1267, %v2529, 0.0
  %2564 = vadd.xlane.f32.xlu0 %v2563
  %v2565 = vpop.xlane.xlu0 %2564
  %v2566 = vsel %vm1267, %v2530, 0.0
  %2567 = vadd.xlane.f32.xlu0 %v2566
  %v2568 = vpop.xlane.xlu0 %2567
  %v2569 = vsel %vm1267, %v2531, 0.0
  %2570 = vadd.xlane.f32.xlu0 %v2569
  %v2571 = vpop.xlane.xlu0 %2570
  %v2572 = vsel %vm1267, %v2532, 0.0
  %2573 = vadd.xlane.f32.xlu0 %v2572
  %v2574 = vpop.xlane.xlu0 %2573
  %v2575 = vsel %vm1267, %v2533, 0.0
  %2576 = vadd.xlane.f32.xlu0 %v2575
  %v2577 = vpop.xlane.xlu0 %2576
  %v2578 = vsel %vm1267, %v2534, 0.0
  %2579 = vadd.xlane.f32.xlu0 %v2578
  %v2580 = vpop.xlane.xlu0 %2579
  %v2581 = vsel %vm1267, %v2535, 0.0
  %2582 = vadd.xlane.f32.xlu0 %v2581
  %v2583 = vpop.xlane.xlu0 %2582
  %v2585 = vlaneseq
  %v2586 = vshrl.u32 %v2585, 7
  %v2587 = vsub.s32 0, %v2586
  %v2588 = vrot.slane %v43, %v2587
  %v2590 = vadd.f32 %v2538, %v2588
  %v2591 = vadd.f32 %v2541, %v2588
  %v2592 = vadd.f32 %v2544, %v2588
  %v2593 = vadd.f32 %v2547, %v2588
  %v2594 = vadd.f32 %v2550, %v2588
  %v2595 = vadd.f32 %v2553, %v2588
  %v2596 = vadd.f32 %v2556, %v2588
  %v2597 = vadd.f32 %v2559, %v2588
  %v2598 = vadd.f32 %v2562, %v2588
  %v2599 = vadd.f32 %v2565, %v2588
  %v2600 = vadd.f32 %v2568, %v2588
  %v2601 = vadd.f32 %v2571, %v2588
  %v2602 = vadd.f32 %v2574, %v2588
  %v2603 = vadd.f32 %v2577, %v2588
  %v2604 = vadd.f32 %v2580, %v2588
  %v2605 = vadd.f32 %v2583, %v2588
  %vm2606 = vcmask 7168
  %2607 = vst.msk [vmem:[%s7] sm:$0xff] %vm2606, %v2590
  %2608 = vst.msk [vmem:[%s7 + $0x8] sm:$0xff] %vm2606, %v2591
  %2609 = vst.msk [vmem:[%s7 + $0x10] sm:$0xff] %vm2606, %v2592
  %2610 = vst.msk [vmem:[%s7 + $0x18] sm:$0xff] %vm2606, %v2593
  %2611 = vst.msk [vmem:[%s7 + $0x20] sm:$0xff] %vm2606, %v2594
  %2612 = vst.msk [vmem:[%s7 + $0x28] sm:$0xff] %vm2606, %v2595
  %2613 = vst.msk [vmem:[%s7 + $0x30] sm:$0xff] %vm2606, %v2596
  %2614 = vst.msk [vmem:[%s7 + $0x38] sm:$0xff] %vm2606, %v2597
  %2615 = vst.msk [vmem:[%s7 + $0x40] sm:$0xff] %vm2606, %v2598
  %2616 = vst.msk [vmem:[%s7 + $0x48] sm:$0xff] %vm2606, %v2599
  %2617 = vst.msk [vmem:[%s7 + $0x50] sm:$0xff] %vm2606, %v2600
  %2618 = vst.msk [vmem:[%s7 + $0x58] sm:$0xff] %vm2606, %v2601
  %2619 = vst.msk [vmem:[%s7 + $0x60] sm:$0xff] %vm2606, %v2602
  %2620 = vst.msk [vmem:[%s7 + $0x68] sm:$0xff] %vm2606, %v2603
  %2621 = vst.msk [vmem:[%s7 + $0x70] sm:$0xff] %vm2606, %v2604
  %2622 = vst.msk [vmem:[%s7 + $0x78] sm:$0xff] %vm2606, %v2605
  // Predicated region
  $region30: #{tpu_custom_call.1} parent=0 // pred_check
    _
  $region31: #{tpu_custom_call.1} parent=0 // pred_check_branch
    %2624 = sbr.rel (0) target = $region33
  $region32: #{tpu_custom_call.1} parent=0 // pred_region
    _
  $region33: #{tpu_custom_call.1} parent=0 // pred_fallthru
    _
  // Predicated region
  $region34: #{tpu_custom_call.1} parent=0 // pred_check
    _
  $region35: #{tpu_custom_call.1} parent=0 // pred_check_branch
    %2626 = sbr.rel (0) target = $region37
  $region36: #{tpu_custom_call.1} parent=0 // pred_region
    _
  $region37: #{tpu_custom_call.1} parent=0 // pred_fallthru
    _

</llo_original>
